<compile_context>
chip_gen: v5e
topology: v5e:2x2
jax: 0.10.0
libtpu: 0.0.40
codegen_flags: <defaults>
</compile_context>

<pallas_src>
import jax
import jax.numpy as jnp
from jax.experimental import pallas as pl
from jax.experimental.pallas import tpu as pltpu


def _round_up(x, m):
    return (x + m - 1) // m * m


def _vmem_budget_bytes():
    """Generation-aware usable-VMEM budget (headroom left for compiler scratch)."""
    try:
        cap = int(pltpu.get_tpu_info().vmem_capacity_bytes)
    except Exception:
        cap = 64 << 20  # conservative: assume v7x-sized VMEM if the query fails
    # ~48 MiB on v7x (64 MiB physical), ~96 MiB on v5e/v6e (128 MiB physical).
    return min(int(cap * 3 // 4), 100 << 20)


def _per_row_vmem_bytes(F, Hp, Lp, out_bytes):
    # Double-buffered f32 x tile + double-buffered out tile + in-kernel bf16 copy
    # of x + f32/bf16 hidden intermediates (generous).
    return 2 * F * 4 + 2 * Lp * out_bytes + F * 2 + 6 * Hp * 4


def _resident_vmem_bytes(F, Hp, Lp):
    # Single-buffered bf16 weights + f32 scale/shift/bias rows.
    return (F * Hp + Hp * Hp + Hp * Lp) * 2 + (4 * Hp + Lp) * 4


def _choose_batch_tile(B, F, Hp, Lp, budget, out_bytes):
    """Pick the batch tile TB from the VMEM budget (budget drives the tiling)."""
    per_row = _per_row_vmem_bytes(F, Hp, Lp, out_bytes)
    avail = budget - _resident_vmem_bytes(F, Hp, Lp) - (2 << 20)  # 2 MiB slack
    if avail < 16 * per_row:
        # Would need a K grid axis over F with an f32 accumulator (pl.when
        # init/finalize) -- not required at these model sizes.
        raise ValueError("numOfFeatures too large for a VMEM-resident w1; "
                         "K-tiling over the feature axis would be required.")
    tb_fit = int(avail // per_row)

    if B <= tb_fit and B <= 2048:
        # Whole batch in one (or one rounded-up) tile: minimal padding.
        TB = _round_up(max(B, 16), 16)
    else:
        TB = min(2048, tb_fit)
        align = 256 if TB >= 256 else (128 if TB >= 128 else 16)
        TB = max((TB // align) * align, 16)

    # Guarantee >=2 grid steps for large batches so the "parallel" batch axis can
    # shard across both v7x TensorCores (one extra ~0.35us step on single-TC
    # v5e/v6e is negligible).
    if B >= 512:
        TB = min(TB, _round_up((B + 1) // 2, 128))
    return max(TB, 16)


def _mlp_kernel(x_ref, w1_ref, s1_ref, t1_ref,
                w2_ref, s2_ref, t2_ref,
                w3_ref, b3_ref, out_ref):
    # Layer 1: Linear (bias folded into BN shift) -> BN -> ReLU.
    # x streams in as f32; the bf16 cast happens here (no wrapper-side round trip).
    x = x_ref[...].astype(jnp.bfloat16)                              # (TB, F)
    h1 = jnp.dot(x, w1_ref[...], preferred_element_type=jnp.float32)
    h1 = jnp.maximum(h1 * s1_ref[...] + t1_ref[...], 0.0)           # f32 VPU path

    # Layer 2: Linear -> BN -> ReLU.
    h2 = jnp.dot(h1.astype(jnp.bfloat16), w2_ref[...],
                 preferred_element_type=jnp.float32)
    h2 = jnp.maximum(h2 * s2_ref[...] + t2_ref[...], 0.0)

    # Output layer: Linear (real bias), f32 accumulate.
    out = jnp.dot(h2.astype(jnp.bfloat16), w3_ref[...],
                  preferred_element_type=jnp.float32) + b3_ref[...]
    out_ref[...] = out.astype(out_ref.dtype)


def mlp_net_forward(x_nchw, params, eps=1e-5, out_dtype=jnp.float32):
    """Forward pass of MLPNet.  x_nchw: [B, C, H, W].  BatchNorm in eval mode."""
    B = x_nchw.shape[0]
    # nn.Flatten(): row-major reshape (a view, no HBM copy); x stays f32 -- the bf16
    # cast is done inside the kernel.
    x = x_nchw.reshape(B, -1).astype(jnp.float32)
    F = x.shape[1]
    H = params["w1"].shape[0]
    L = params["w3"].shape[0]

    # Lane-pad hidden/output widths to exactly 128 (full MXU pass, lane-dense stores).
    Hp = _round_up(H, 128)
    Lp = _round_up(L, 128)

    out_bytes = jnp.dtype(out_dtype).itemsize
    budget = _vmem_budget_bytes()
    TB = _choose_batch_tile(B, F, Hp, Lp, budget, out_bytes)
    B_pad = _round_up(B, TB)

    def pad2(a, r, c):
        return jnp.pad(a, ((0, r - a.shape[0]), (0, c - a.shape[1])))

    # Transpose PyTorch [out,in] weights to [in,out], zero-pad, cast to bf16.
    w1 = pad2(params["w1"].T.astype(jnp.float32), F, Hp).astype(jnp.bfloat16)
    w2 = pad2(params["w2"].T.astype(jnp.float32), Hp, Hp).astype(jnp.bfloat16)
    w3 = pad2(params["w3"].T.astype(jnp.float32), Hp, Lp).astype(jnp.bfloat16)

    # Fold BatchNorm1d (eval mode) AND the preceding Linear bias into scale/shift:
    #   s*(xW + b) + (beta - mean*s)  ==  (xW)*s + (beta + s*(b - mean))
    def fold(gamma, beta, mean, var, bias):
        s = gamma / jnp.sqrt(var + eps)
        t = beta + s * (bias - mean)
        s = jnp.pad(s.astype(jnp.float32), (0, Hp - H)).reshape(1, Hp)
        t = jnp.pad(t.astype(jnp.float32), (0, Hp - H)).reshape(1, Hp)
        return s, t

    s1, t1 = fold(params["bn1_gamma"], params["bn1_beta"],
                  params["bn1_mean"], params["bn1_var"], params["b1"])
    s2, t2 = fold(params["bn2_gamma"], params["bn2_beta"],
                  params["bn2_mean"], params["bn2_var"], params["b2"])
    b3 = jnp.pad(params["b3"].astype(jnp.float32), (0, Lp - L)).reshape(1, Lp)

    # Only materialize a batch-pad copy when B is not a multiple of TB.
    x_in = x if B_pad == B else jnp.pad(x, ((0, B_pad - B), (0, 0)))

    # VMEM limit derived from the actual need (single-buffered residents), clamped
    # to the generation-aware budget (never exceeds it thanks to _choose_batch_tile).
    vmem_need = (_resident_vmem_bytes(F, Hp, Lp)
                 + TB * _per_row_vmem_bytes(F, Hp, Lp, out_bytes))
    vmem_limit = int(min(max(vmem_need + (2 << 20), 16 << 20), budget))

    grid = (B_pad // TB,)

    def call(single_buffer_resident):
        if single_buffer_resident:
            # Constant-index blocks never re-fetch; one pipeline buffer is enough.
            resident = lambda shape: pl.BlockSpec(
                shape, lambda i: (0, 0), pipeline_mode=pl.Buffered(1))
        else:
            resident = lambda shape: pl.BlockSpec(shape, lambda i: (0, 0))
        return pl.pallas_call(
            _mlp_kernel,
            out_shape=jax.ShapeDtypeStruct((B_pad, Lp), out_dtype),
            grid_spec=pl.GridSpec(
                grid=grid,
                in_specs=[
                    pl.BlockSpec((TB, F), lambda i: (i, 0)),   # x: streamed (f32)
                    resident((F, Hp)),                         # w1
                    resident((1, Hp)),                         # bn1 scale
                    resident((1, Hp)),                         # bn1 shift (bias folded)
                    resident((Hp, Hp)),                        # w2
                    resident((1, Hp)),                         # bn2 scale
                    resident((1, Hp)),                         # bn2 shift (bias folded)
                    resident((Hp, Lp)),                        # w3
                    resident((1, Lp)),                         # b3
                ],
                out_specs=pl.BlockSpec((TB, Lp), lambda i: (i, 0)),
            ),
            compiler_params=pltpu.CompilerParams(
                dimension_semantics=("parallel",),   # megacore / v7x 2-TC sharding
                vmem_limit_bytes=vmem_limit,
            ),
        )(x_in, w1, s1, t1, w2, s2, t2, w3, b3)

    try:
        out = call(True)
    except Exception:
        # Fallback for jax versions that reject pl.Buffered(1) on resident blocks.
        out = call(False)

    # Drop batch padding and lane padding (free XLA glue).
    return out[:B, :L]


def init_params(key, num_features, num_labels, num_neurons=32):
    """Deterministic synthetic init (shapes match nn.Linear / nn.BatchNorm1d)."""
    ks = jax.random.split(key, 6)

    def linear_init(kw, kb, fan_in, fan_out):
        bound = 1.0 / jnp.sqrt(fan_in)
        w = jax.random.uniform(kw, (fan_out, fan_in), jnp.float32, -bound, bound)
        b = jax.random.uniform(kb, (fan_out,), jnp.float32, -bound, bound)
        return w, b

    w1, b1 = linear_init(ks[0], ks[1], num_features, num_neurons)
    w2, b2 = linear_init(ks[2], ks[3], num_neurons, num_neurons)
    w3, b3 = linear_init(ks[4], ks[5], num_neurons, num_labels)

    return {
        "w1": w1, "b1": b1,
        "bn1_gamma": jnp.ones((num_neurons,), jnp.float32),
        "bn1_beta": jnp.zeros((num_neurons,), jnp.float32),
        "bn1_mean": jnp.zeros((num_neurons,), jnp.float32),
        "bn1_var": jnp.ones((num_neurons,), jnp.float32),
        "w2": w2, "b2": b2,
        "bn2_gamma": jnp.ones((num_neurons,), jnp.float32),
        "bn2_beta": jnp.zeros((num_neurons,), jnp.float32),
        "bn2_mean": jnp.zeros((num_neurons,), jnp.float32),
        "bn2_var": jnp.ones((num_neurons,), jnp.float32),
        "w3": w3, "b3": b3,
    }


def _reference(x_nchw, params, eps=1e-5):
    """Pure-JAX reference: unfused Linear -> BN(eval) -> ReLU stack.

    Matmul inputs are bf16-rounded with f32 accumulation to mirror the kernel's
    numerics; BN uses the explicit (h - mean)/sqrt(var+eps)*gamma + beta form so
    the kernel's bias/BN fold is actually exercised.
    """
    B = x_nchw.shape[0]
    xf = x_nchw.reshape(B, -1).astype(jnp.float32)

    def bn(h, g, b, m, v):
        return (h - m) / jnp.sqrt(v + eps) * g + b

    w1 = params["w1"].astype(jnp.bfloat16)
    w2 = params["w2"].astype(jnp.bfloat16)
    w3 = params["w3"].astype(jnp.bfloat16)

    h = jnp.dot(xf.astype(jnp.bfloat16), w1.T,
                preferred_element_type=jnp.float32) + params["b1"]
    h = jnp.maximum(bn(h, params["bn1_gamma"], params["bn1_beta"],
                       params["bn1_mean"], params["bn1_var"]), 0.0)
    h = jnp.dot(h.astype(jnp.bfloat16), w2.T,
                preferred_element_type=jnp.float32) + params["b2"]
    h = jnp.maximum(bn(h, params["bn2_gamma"], params["bn2_beta"],
                       params["bn2_mean"], params["bn2_var"]), 0.0)
    return jnp.dot(h.astype(jnp.bfloat16), w3.T,
                   preferred_element_type=jnp.float32) + params["b3"]


if __name__ == "__main__":
    key = jax.random.PRNGKey(0)
    k_x, k_p, k_bn = jax.random.split(key, 3)

    # Small shapes: batch=2, channels=4, spatial=16 -> numOfFeatures = 4*16*16.
    B, C, Hs, Ws = 2, 4, 16, 16
    num_features = C * Hs * Ws
    num_labels = 10
    num_neurons = 32

    x = jax.random.normal(k_x, (B, C, Hs, Ws), jnp.float32)
    params = init_params(k_p, num_features, num_labels, num_neurons)

    # Non-trivial BatchNorm affine params + running stats so the fold is exercised.
    kb = jax.random.split(k_bn, 8)
    params["bn1_gamma"] = 1.0 + 0.1 * jax.random.normal(kb[0], (num_neurons,), jnp.float32)
    params["bn1_beta"] = 0.1 * jax.random.normal(kb[1], (num_neurons,), jnp.float32)
    params["bn1_mean"] = 0.1 * jax.random.normal(kb[2], (num_neurons,), jnp.float32)
    params["bn1_var"] = jnp.abs(1.0 + 0.1 * jax.random.normal(kb[3], (num_neurons,), jnp.float32))
    params["bn2_gamma"] = 1.0 + 0.1 * jax.random.normal(kb[4], (num_neurons,), jnp.float32)
    params["bn2_beta"] = 0.1 * jax.random.normal(kb[5], (num_neurons,), jnp.float32)
    params["bn2_mean"] = 0.1 * jax.random.normal(kb[6], (num_neurons,), jnp.float32)
    params["bn2_var"] = jnp.abs(1.0 + 0.1 * jax.random.normal(kb[7], (num_neurons,), jnp.float32))

    logits = mlp_net_forward(x, params)
    jax.block_until_ready(logits)

    ref = _reference(x, params)
    assert logits.shape == (B, num_labels), logits.shape
    max_err = float(jnp.max(jnp.abs(logits - ref)))
    assert jnp.allclose(logits, ref, atol=1e-3, rtol=1e-3), f"max_err={max_err}"

    print("KERNEL_OK")
</pallas_src>

<mosaic_0001>
module attributes {stable_mosaic.version = 11 : i64} {
  func.func @_mlp_kernel(%arg0: i32, %arg1: memref<16x1024xf32, #tpu.memory_space<vmem>>, %arg2: memref<1024x128xbf16, #tpu.memory_space<vmem>>, %arg3: memref<1x128xf32, #tpu.memory_space<vmem>>, %arg4: memref<1x128xf32, #tpu.memory_space<vmem>>, %arg5: memref<128x128xbf16, #tpu.memory_space<vmem>>, %arg6: memref<1x128xf32, #tpu.memory_space<vmem>>, %arg7: memref<1x128xf32, #tpu.memory_space<vmem>>, %arg8: memref<128x128xbf16, #tpu.memory_space<vmem>>, %arg9: memref<1x128xf32, #tpu.memory_space<vmem>>, %arg10: memref<16x128xf32, #tpu.memory_space<vmem>>) attributes {dimension_semantics = [#tpu.dimension_semantics<parallel>], iteration_bounds = array<i64: 1>, scalar_prefetch = 0 : i64, scratch_operands = 0 : i64, tpu.core_type = #tpu.core_type<tc>, window_params = [{transform_indices = @transform_0, window_bounds = array<i64: 16, 1024>}, {pipeline_mode = #tpu.pipeline_mode<synchronous>, transform_indices = @transform_1, window_bounds = array<i64: 1024, 128>}, {pipeline_mode = #tpu.pipeline_mode<synchronous>, transform_indices = @transform_2, window_bounds = array<i64: 1, 128>}, {pipeline_mode = #tpu.pipeline_mode<synchronous>, transform_indices = @transform_3, window_bounds = array<i64: 1, 128>}, {pipeline_mode = #tpu.pipeline_mode<synchronous>, transform_indices = @transform_4, window_bounds = array<i64: 128, 128>}, {pipeline_mode = #tpu.pipeline_mode<synchronous>, transform_indices = @transform_5, window_bounds = array<i64: 1, 128>}, {pipeline_mode = #tpu.pipeline_mode<synchronous>, transform_indices = @transform_6, window_bounds = array<i64: 1, 128>}, {pipeline_mode = #tpu.pipeline_mode<synchronous>, transform_indices = @transform_7, window_bounds = array<i64: 128, 128>}, {pipeline_mode = #tpu.pipeline_mode<synchronous>, transform_indices = @transform_8, window_bounds = array<i64: 1, 128>}, {transform_indices = @transform_9, window_bounds = array<i64: 16, 128>}]} {
    %c0 = arith.constant 0 : index
    %c0_0 = arith.constant 0 : index
    %0 = vector.load %arg1[%c0, %c0_0] : memref<16x1024xf32, #tpu.memory_space<vmem>>, vector<16x1024xf32>
    %1 = arith.truncf %0 : vector<16x1024xf32> to vector<16x1024xbf16>
    %c0_1 = arith.constant 0 : index
    %c0_2 = arith.constant 0 : index
    %2 = vector.load %arg2[%c0_1, %c0_2] : memref<1024x128xbf16, #tpu.memory_space<vmem>>, vector<1024x128xbf16>
    %cst = arith.constant dense<0.000000e+00> : vector<16x128xf32>
    %3 = tpu.matmul %1, %2, %cst {dimension_numbers = #tpu.dot_dimension_numbers<[1], [0], [0], [1], [0, 0, 1, 1], [], []>} : vector<16x1024xbf16>, vector<1024x128xbf16>, vector<16x128xf32> -> vector<16x128xf32>
    %c0_3 = arith.constant 0 : index
    %c0_4 = arith.constant 0 : index
    %4 = vector.load %arg3[%c0_3, %c0_4] : memref<1x128xf32, #tpu.memory_space<vmem>>, vector<1x128xf32>
    %5 = vector.broadcast %4 : vector<1x128xf32> to vector<16x128xf32>
    %6 = arith.mulf %3, %5 : vector<16x128xf32>
    %c0_5 = arith.constant 0 : index
    %c0_6 = arith.constant 0 : index
    %7 = vector.load %arg4[%c0_5, %c0_6] : memref<1x128xf32, #tpu.memory_space<vmem>>, vector<1x128xf32>
    %8 = vector.broadcast %7 : vector<1x128xf32> to vector<16x128xf32>
    %9 = arith.addf %6, %8 : vector<16x128xf32>
    %cst_7 = arith.constant 0.000000e+00 : f32
    %10 = vector.broadcast %cst_7 : f32 to vector<16x128xf32>
    %11 = arith.maximumf %9, %10 : vector<16x128xf32>
    %12 = arith.truncf %11 : vector<16x128xf32> to vector<16x128xbf16>
    %c0_8 = arith.constant 0 : index
    %c0_9 = arith.constant 0 : index
    %13 = vector.load %arg5[%c0_8, %c0_9] : memref<128x128xbf16, #tpu.memory_space<vmem>>, vector<128x128xbf16>
    %cst_10 = arith.constant dense<0.000000e+00> : vector<16x128xf32>
    %14 = tpu.matmul %12, %13, %cst_10 {dimension_numbers = #tpu.dot_dimension_numbers<[1], [0], [0], [1], [0, 0, 1, 1], [], []>} : vector<16x128xbf16>, vector<128x128xbf16>, vector<16x128xf32> -> vector<16x128xf32>
    %c0_11 = arith.constant 0 : index
    %c0_12 = arith.constant 0 : index
    %15 = vector.load %arg6[%c0_11, %c0_12] : memref<1x128xf32, #tpu.memory_space<vmem>>, vector<1x128xf32>
    %16 = vector.broadcast %15 : vector<1x128xf32> to vector<16x128xf32>
    %17 = arith.mulf %14, %16 : vector<16x128xf32>
    %c0_13 = arith.constant 0 : index
    %c0_14 = arith.constant 0 : index
    %18 = vector.load %arg7[%c0_13, %c0_14] : memref<1x128xf32, #tpu.memory_space<vmem>>, vector<1x128xf32>
    %19 = vector.broadcast %18 : vector<1x128xf32> to vector<16x128xf32>
    %20 = arith.addf %17, %19 : vector<16x128xf32>
    %cst_15 = arith.constant 0.000000e+00 : f32
    %21 = vector.broadcast %cst_15 : f32 to vector<16x128xf32>
    %22 = arith.maximumf %20, %21 : vector<16x128xf32>
    %23 = arith.truncf %22 : vector<16x128xf32> to vector<16x128xbf16>
    %c0_16 = arith.constant 0 : index
    %c0_17 = arith.constant 0 : index
    %24 = vector.load %arg8[%c0_16, %c0_17] : memref<128x128xbf16, #tpu.memory_space<vmem>>, vector<128x128xbf16>
    %cst_18 = arith.constant dense<0.000000e+00> : vector<16x128xf32>
    %25 = tpu.matmul %23, %24, %cst_18 {dimension_numbers = #tpu.dot_dimension_numbers<[1], [0], [0], [1], [0, 0, 1, 1], [], []>} : vector<16x128xbf16>, vector<128x128xbf16>, vector<16x128xf32> -> vector<16x128xf32>
    %c0_19 = arith.constant 0 : index
    %c0_20 = arith.constant 0 : index
    %26 = vector.load %arg9[%c0_19, %c0_20] : memref<1x128xf32, #tpu.memory_space<vmem>>, vector<1x128xf32>
    %27 = vector.broadcast %26 : vector<1x128xf32> to vector<16x128xf32>
    %28 = arith.addf %25, %27 : vector<16x128xf32>
    %c0_21 = arith.constant 0 : index
    %c0_22 = arith.constant 0 : index
    %29 = vector.load %arg10[%c0_21, %c0_22] : memref<16x128xf32, #tpu.memory_space<vmem>>, vector<16x128xf32>
    tpu.vector_store %arg10[%c0_21, %c0_22], %28 {strides = array<i32>} : memref<16x128xf32, #tpu.memory_space<vmem>>, vector<16x128xf32>,
    return
  }
  func.func @transform_0(%arg0: i32) -> (i32, i32) {
    %c0_i32 = arith.constant 0 : i32
    %c0_i32_0 = arith.constant 0 : i32
    return %arg0, %c0_i32 : i32, i32
  }
  func.func @transform_1(%arg0: i32) -> (i32, i32) {
    %c0_i32 = arith.constant 0 : i32
    %c0_i32_0 = arith.constant 0 : i32
    %c0_i32_1 = arith.constant 0 : i32
    return %c0_i32, %c0_i32_0 : i32, i32
  }
  func.func @transform_2(%arg0: i32) -> (i32, i32) {
    %c0_i32 = arith.constant 0 : i32
    %c0_i32_0 = arith.constant 0 : i32
    %c0_i32_1 = arith.constant 0 : i32
    return %c0_i32, %c0_i32_0 : i32, i32
  }
  func.func @transform_3(%arg0: i32) -> (i32, i32) {
    %c0_i32 = arith.constant 0 : i32
    %c0_i32_0 = arith.constant 0 : i32
    %c0_i32_1 = arith.constant 0 : i32
    return %c0_i32, %c0_i32_0 : i32, i32
  }
  func.func @transform_4(%arg0: i32) -> (i32, i32) {
    %c0_i32 = arith.constant 0 : i32
    %c0_i32_0 = arith.constant 0 : i32
    %c0_i32_1 = arith.constant 0 : i32
    return %c0_i32, %c0_i32_0 : i32, i32
  }
  func.func @transform_5(%arg0: i32) -> (i32, i32) {
    %c0_i32 = arith.constant 0 : i32
    %c0_i32_0 = arith.constant 0 : i32
    %c0_i32_1 = arith.constant 0 : i32
    return %c0_i32, %c0_i32_0 : i32, i32
  }
  func.func @transform_6(%arg0: i32) -> (i32, i32) {
    %c0_i32 = arith.constant 0 : i32
    %c0_i32_0 = arith.constant 0 : i32
    %c0_i32_1 = arith.constant 0 : i32
    return %c0_i32, %c0_i32_0 : i32, i32
  }
  func.func @transform_7(%arg0: i32) -> (i32, i32) {
    %c0_i32 = arith.constant 0 : i32
    %c0_i32_0 = arith.constant 0 : i32
    %c0_i32_1 = arith.constant 0 : i32
    return %c0_i32, %c0_i32_0 : i32, i32
  }
  func.func @transform_8(%arg0: i32) -> (i32, i32) {
    %c0_i32 = arith.constant 0 : i32
    %c0_i32_0 = arith.constant 0 : i32
    %c0_i32_1 = arith.constant 0 : i32
    return %c0_i32, %c0_i32_0 : i32, i32
  }
  func.func @transform_9(%arg0: i32) -> (i32, i32) {
    %c0_i32 = arith.constant 0 : i32
    %c0_i32_0 = arith.constant 0 : i32
    return %arg0, %c0_i32 : i32, i32
  }
}

module attributes {stable_mosaic.version = 11 : i64} {
  func.func @_mlp_kernel(%arg0: i32, %arg1: memref<16x1024xf32, #tpu.memory_space<vmem>>, %arg2: memref<1024x128xbf16, #tpu.memory_space<vmem>>, %arg3: memref<1x128xf32, #tpu.memory_space<vmem>>, %arg4: memref<1x128xf32, #tpu.memory_space<vmem>>, %arg5: memref<128x128xbf16, #tpu.memory_space<vmem>>, %arg6: memref<1x128xf32, #tpu.memory_space<vmem>>, %arg7: memref<1x128xf32, #tpu.memory_space<vmem>>, %arg8: memref<128x128xbf16, #tpu.memory_space<vmem>>, %arg9: memref<1x128xf32, #tpu.memory_space<vmem>>, %arg10: memref<16x128xf32, #tpu.memory_space<vmem>>) attributes {dimension_semantics = [#tpu.dimension_semantics<parallel>], iteration_bounds = array<i64: 1>, scalar_prefetch = 0 : i64, scratch_operands = 0 : i64, tpu.core_type = #tpu.core_type<tc>, window_params = [{transform_indices = @transform_0, window_bounds = array<i64: 16, 1024>}, {pipeline_mode = #tpu.pipeline_mode<synchronous>, transform_indices = @transform_1, window_bounds = array<i64: 1024, 128>}, {pipeline_mode = #tpu.pipeline_mode<synchronous>, transform_indices = @transform_2, window_bounds = array<i64: 1, 128>}, {pipeline_mode = #tpu.pipeline_mode<synchronous>, transform_indices = @transform_3, window_bounds = array<i64: 1, 128>}, {pipeline_mode = #tpu.pipeline_mode<synchronous>, transform_indices = @transform_4, window_bounds = array<i64: 128, 128>}, {pipeline_mode = #tpu.pipeline_mode<synchronous>, transform_indices = @transform_5, window_bounds = array<i64: 1, 128>}, {pipeline_mode = #tpu.pipeline_mode<synchronous>, transform_indices = @transform_6, window_bounds = array<i64: 1, 128>}, {pipeline_mode = #tpu.pipeline_mode<synchronous>, transform_indices = @transform_7, window_bounds = array<i64: 128, 128>}, {pipeline_mode = #tpu.pipeline_mode<synchronous>, transform_indices = @transform_8, window_bounds = array<i64: 1, 128>}, {transform_indices = @transform_9, window_bounds = array<i64: 16, 128>}]} {
    %c0 = arith.constant 0 : index
    %c0_0 = arith.constant 0 : index
    %0 = vector.load %arg1[%c0, %c0_0] : memref<16x1024xf32, #tpu.memory_space<vmem>>, vector<16x1024xf32>
    %1 = arith.truncf %0 : vector<16x1024xf32> to vector<16x1024xbf16>
    %c0_1 = arith.constant 0 : index
    %c0_2 = arith.constant 0 : index
    %2 = vector.load %arg2[%c0_1, %c0_2] : memref<1024x128xbf16, #tpu.memory_space<vmem>>, vector<1024x128xbf16>
    %cst = arith.constant dense<0.000000e+00> : vector<16x128xf32>
    %3 = tpu.matmul %1, %2, %cst {dimension_numbers = #tpu.dot_dimension_numbers<[1], [0], [0], [1], [0, 0, 1, 1], [], []>} : vector<16x1024xbf16>, vector<1024x128xbf16>, vector<16x128xf32> -> vector<16x128xf32>
    %c0_3 = arith.constant 0 : index
    %c0_4 = arith.constant 0 : index
    %4 = vector.load %arg3[%c0_3, %c0_4] : memref<1x128xf32, #tpu.memory_space<vmem>>, vector<1x128xf32>
    %5 = vector.broadcast %4 : vector<1x128xf32> to vector<16x128xf32>
    %6 = arith.mulf %3, %5 : vector<16x128xf32>
    %c0_5 = arith.constant 0 : index
    %c0_6 = arith.constant 0 : index
    %7 = vector.load %arg4[%c0_5, %c0_6] : memref<1x128xf32, #tpu.memory_space<vmem>>, vector<1x128xf32>
    %8 = vector.broadcast %7 : vector<1x128xf32> to vector<16x128xf32>
    %9 = arith.addf %6, %8 : vector<16x128xf32>
    %cst_7 = arith.constant 0.000000e+00 : f32
    %10 = vector.broadcast %cst_7 : f32 to vector<16x128xf32>
    %11 = arith.maximumf %9, %10 : vector<16x128xf32>
    %12 = arith.truncf %11 : vector<16x128xf32> to vector<16x128xbf16>
    %c0_8 = arith.constant 0 : index
    %c0_9 = arith.constant 0 : index
    %13 = vector.load %arg5[%c0_8, %c0_9] : memref<128x128xbf16, #tpu.memory_space<vmem>>, vector<128x128xbf16>
    %cst_10 = arith.constant dense<0.000000e+00> : vector<16x128xf32>
    %14 = tpu.matmul %12, %13, %cst_10 {dimension_numbers = #tpu.dot_dimension_numbers<[1], [0], [0], [1], [0, 0, 1, 1], [], []>} : vector<16x128xbf16>, vector<128x128xbf16>, vector<16x128xf32> -> vector<16x128xf32>
    %c0_11 = arith.constant 0 : index
    %c0_12 = arith.constant 0 : index
    %15 = vector.load %arg6[%c0_11, %c0_12] : memref<1x128xf32, #tpu.memory_space<vmem>>, vector<1x128xf32>
    %16 = vector.broadcast %15 : vector<1x128xf32> to vector<16x128xf32>
    %17 = arith.mulf %14, %16 : vector<16x128xf32>
    %c0_13 = arith.constant 0 : index
    %c0_14 = arith.constant 0 : index
    %18 = vector.load %arg7[%c0_13, %c0_14] : memref<1x128xf32, #tpu.memory_space<vmem>>, vector<1x128xf32>
    %19 = vector.broadcast %18 : vector<1x128xf32> to vector<16x128xf32>
    %20 = arith.addf %17, %19 : vector<16x128xf32>
    %cst_15 = arith.constant 0.000000e+00 : f32
    %21 = vector.broadcast %cst_15 : f32 to vector<16x128xf32>
    %22 = arith.maximumf %20, %21 : vector<16x128xf32>
    %23 = arith.truncf %22 : vector<16x128xf32> to vector<16x128xbf16>
    %c0_16 = arith.constant 0 : index
    %c0_17 = arith.constant 0 : index
    %24 = vector.load %arg8[%c0_16, %c0_17] : memref<128x128xbf16, #tpu.memory_space<vmem>>, vector<128x128xbf16>
    %cst_18 = arith.constant dense<0.000000e+00> : vector<16x128xf32>
    %25 = tpu.matmul %23, %24, %cst_18 {dimension_numbers = #tpu.dot_dimension_numbers<[1], [0], [0], [1], [0, 0, 1, 1], [], []>} : vector<16x128xbf16>, vector<128x128xbf16>, vector<16x128xf32> -> vector<16x128xf32>
    %c0_19 = arith.constant 0 : index
    %c0_20 = arith.constant 0 : index
    %26 = vector.load %arg9[%c0_19, %c0_20] : memref<1x128xf32, #tpu.memory_space<vmem>>, vector<1x128xf32>
    %27 = vector.broadcast %26 : vector<1x128xf32> to vector<16x128xf32>
    %28 = arith.addf %25, %27 : vector<16x128xf32>
    %c0_21 = arith.constant 0 : index
    %c0_22 = arith.constant 0 : index
    %29 = vector.load %arg10[%c0_21, %c0_22] : memref<16x128xf32, #tpu.memory_space<vmem>>, vector<16x128xf32>
    tpu.vector_store %arg10[%c0_21, %c0_22], %28 {strides = array<i32>} : memref<16x128xf32, #tpu.memory_space<vmem>>, vector<16x128xf32>,
    return
  }
  func.func @transform_0(%arg0: i32) -> (i32, i32) {
    %c0_i32 = arith.constant 0 : i32
    %c0_i32_0 = arith.constant 0 : i32
    return %arg0, %c0_i32 : i32, i32
  }
  func.func @transform_1(%arg0: i32) -> (i32, i32) {
    %c0_i32 = arith.constant 0 : i32
    %c0_i32_0 = arith.constant 0 : i32
    %c0_i32_1 = arith.constant 0 : i32
    return %c0_i32, %c0_i32_0 : i32, i32
  }
  func.func @transform_2(%arg0: i32) -> (i32, i32) {
    %c0_i32 = arith.constant 0 : i32
    %c0_i32_0 = arith.constant 0 : i32
    %c0_i32_1 = arith.constant 0 : i32
    return %c0_i32, %c0_i32_0 : i32, i32
  }
  func.func @transform_3(%arg0: i32) -> (i32, i32) {
    %c0_i32 = arith.constant 0 : i32
    %c0_i32_0 = arith.constant 0 : i32
    %c0_i32_1 = arith.constant 0 : i32
    return %c0_i32, %c0_i32_0 : i32, i32
  }
  func.func @transform_4(%arg0: i32) -> (i32, i32) {
    %c0_i32 = arith.constant 0 : i32
    %c0_i32_0 = arith.constant 0 : i32
    %c0_i32_1 = arith.constant 0 : i32
    return %c0_i32, %c0_i32_0 : i32, i32
  }
  func.func @transform_5(%arg0: i32) -> (i32, i32) {
    %c0_i32 = arith.constant 0 : i32
    %c0_i32_0 = arith.constant 0 : i32
    %c0_i32_1 = arith.constant 0 : i32
    return %c0_i32, %c0_i32_0 : i32, i32
  }
  func.func @transform_6(%arg0: i32) -> (i32, i32) {
    %c0_i32 = arith.constant 0 : i32
    %c0_i32_0 = arith.constant 0 : i32
    %c0_i32_1 = arith.constant 0 : i32
    return %c0_i32, %c0_i32_0 : i32, i32
  }
  func.func @transform_7(%arg0: i32) -> (i32, i32) {
    %c0_i32 = arith.constant 0 : i32
    %c0_i32_0 = arith.constant 0 : i32
    %c0_i32_1 = arith.constant 0 : i32
    return %c0_i32, %c0_i32_0 : i32, i32
  }
  func.func @transform_8(%arg0: i32) -> (i32, i32) {
    %c0_i32 = arith.constant 0 : i32
    %c0_i32_0 = arith.constant 0 : i32
    %c0_i32_1 = arith.constant 0 : i32
    return %c0_i32, %c0_i32_0 : i32, i32
  }
  func.func @transform_9(%arg0: i32) -> (i32, i32) {
    %c0_i32 = arith.constant 0 : i32
    %c0_i32_0 = arith.constant 0 : i32
    return %arg0, %c0_i32 : i32, i32
  }
}

</mosaic_0001>

<llo_original>
// kernel: tpu_custom_call.1
$region0: #{tpu_custom_call.1}
  #allocation0 [shape = 'u32[]', space=smem, size = 0x4, offset = 0x4, fixed_abs, tag = 'smem constant byte address 0x4 - core index']
  #allocation1 [shape = 'u32[72,128]{1,0:T(1,128)}', space=vmem, size = 0x9000, scoped, tag = 'internal scratch']
  %s0 = inlined_call_operand.hbm [shape: f32[16,1024], index: 0, kind: input, shape index: {}]
  %s1 = inlined_call_operand.hbm [shape: bf16[1024,128], index: 1, kind: input, shape index: {}]
  %s2 = inlined_call_operand.vmem [shape: f32[1,128], index: 2, kind: input, shape index: {}]
  %s3 = inlined_call_operand.vmem [shape: f32[1,128], index: 3, kind: input, shape index: {}]
  %s4 = inlined_call_operand.hbm [shape: bf16[128,128], index: 4, kind: input, shape index: {}]
  %s5 = inlined_call_operand.vmem [shape: f32[1,128], index: 5, kind: input, shape index: {}]
  %s6 = inlined_call_operand.vmem [shape: f32[1,128], index: 6, kind: input, shape index: {}]
  %s7 = inlined_call_operand.hbm [shape: bf16[128,128], index: 7, kind: input, shape index: {}]
  %s8 = inlined_call_operand.vmem [shape: f32[1,128], index: 8, kind: input, shape index: {}]
  %s9 = inlined_call_operand.hbm [shape: f32[16,128], index: 9, kind: output, shape index: {}]
  %s10 = sld [smem:[#allocation0]]
  $region62: #{tpu_custom_call.1} parent=0
    _
  %s12 = ssub.s32 1, %s10
  %s13 = scalar_select 0, %s12, %s10
  $region1: #{tpu_custom_call.1} parent=0
    #allocation2 [shape = 'u8[65536]{0}', space=vmem, size = 0x10000, scoped, tag = 'input window, operand 0, single buffered']
    #allocation3 [shape = 's32[1]{0}', space=sflag, size = 0x4, scoped, tag = 'scoped memory for tpu_custom_call.1']
    #allocation4 [shape = 's32[1]{0}', space=sflag, size = 0x4, scoped, tag = 'scoped memory for tpu_custom_call.1']
    #allocation5 [shape = 'u8[262144]{0}', space=vmem, size = 0x40000, scoped, tag = 'input window, operand 1, single buffered']
    #allocation6 [shape = 's32[1]{0}', space=sflag, size = 0x4, scoped, tag = 'scoped memory for tpu_custom_call.1']
    #allocation7 [shape = 'u8[32768]{0}', space=vmem, size = 0x8000, scoped, tag = 'input window, operand 4, single buffered']
    #allocation8 [shape = 'u8[32768]{0}', space=vmem, size = 0x8000, scoped, tag = 'input window, operand 7, single buffered']
    #allocation9 [shape = 's32[1]{0}', space=sflag, size = 0x4, scoped, tag = 'scoped memory for tpu_custom_call.1']
    #allocation10 [shape = 'u8[8192]{0}', space=vmem, size = 0x2000, scoped, tag = 'output window, operand 0, single buffered']
    %14 = vsyncpa [#allocation3], 0
    %15 = vsyncpa [#allocation6], 0
    %16 = vsyncpa [#allocation9], 0
    %17 = vsyncpa [#allocation4], 0
    // Predicated region
    $region2: #{tpu_custom_call.1} parent=1 // pred_check
      _
    $region3: #{tpu_custom_call.1} parent=1 // pred_check_branch
      %19 = sbr.rel (0) target = $region5
    $region4: #{tpu_custom_call.1} parent=1 // pred_region
      %21 = vsyncadd [#allocation3], 0
      %s22 = sshll.u32 %s0, 4
      %s23 = int_to_ptr.hbm [resolvable:$true] %s22
      %s24 = sshll.u32 [#allocation2], 4
      %s25 = int_to_ptr.vmem [resolvable:$true] %s24
      %30 = dma.hbm_to_vmem [thread:$0]  %s23, 2048, %s25, [#allocation3], 1024, 1024, 64
    $region5: #{tpu_custom_call.1} parent=1 // pred_fallthru
      _
    // Predicated region
    $region6: #{tpu_custom_call.1} parent=1 // pred_check
      _
    $region7: #{tpu_custom_call.1} parent=1 // pred_check_branch
      %32 = sbr.rel (0) target = $region9
    $region8: #{tpu_custom_call.1} parent=1 // pred_region
      %34 = vsyncadd [#allocation6], 0
      %s35 = sshll.u32 %s1, 4
      %s36 = int_to_ptr.hbm [resolvable:$true] %s35
      %s37 = sshll.u32 [#allocation5], 4
      %s38 = int_to_ptr.vmem [resolvable:$true] %s37
      %43 = dma.hbm_to_vmem [thread:$0]  %s36, 8192, %s38, [#allocation6], 64, 64, 4
    $region9: #{tpu_custom_call.1} parent=1 // pred_fallthru
      _
    // Predicated region
    $region10: #{tpu_custom_call.1} parent=1 // pred_check
      _
    $region11: #{tpu_custom_call.1} parent=1 // pred_check_branch
      %45 = sbr.rel (0) target = $region13
    $region12: #{tpu_custom_call.1} parent=1 // pred_region
      _
    $region13: #{tpu_custom_call.1} parent=1 // pred_fallthru
      _
    // Predicated region
    $region14: #{tpu_custom_call.1} parent=1 // pred_check
      _
    $region15: #{tpu_custom_call.1} parent=1 // pred_check_branch
      %47 = sbr.rel (0) target = $region17
    $region16: #{tpu_custom_call.1} parent=1 // pred_region
      _
    $region17: #{tpu_custom_call.1} parent=1 // pred_fallthru
      _
    // Predicated region
    $region18: #{tpu_custom_call.1} parent=1 // pred_check
      _
    $region19: #{tpu_custom_call.1} parent=1 // pred_check_branch
      %49 = sbr.rel (0) target = $region21
    $region20: #{tpu_custom_call.1} parent=1 // pred_region
      %51 = vsyncadd [#allocation6], 0
      %s52 = sshll.u32 %s4, 4
      %s53 = int_to_ptr.hbm [resolvable:$true] %s52
      %s54 = sshll.u32 [#allocation7], 4
      %s55 = int_to_ptr.vmem [resolvable:$true] %s54
      %60 = dma.hbm_to_vmem [thread:$0]  %s53, 1024, %s55, [#allocation6], 64, 64, 4
    $region21: #{tpu_custom_call.1} parent=1 // pred_fallthru
      _
    // Predicated region
    $region22: #{tpu_custom_call.1} parent=1 // pred_check
      _
    $region23: #{tpu_custom_call.1} parent=1 // pred_check_branch
      %62 = sbr.rel (0) target = $region25
    $region24: #{tpu_custom_call.1} parent=1 // pred_region
      _
    $region25: #{tpu_custom_call.1} parent=1 // pred_fallthru
      _
    // Predicated region
    $region26: #{tpu_custom_call.1} parent=1 // pred_check
      _
    $region27: #{tpu_custom_call.1} parent=1 // pred_check_branch
      %64 = sbr.rel (0) target = $region29
    $region28: #{tpu_custom_call.1} parent=1 // pred_region
      _
    $region29: #{tpu_custom_call.1} parent=1 // pred_fallthru
      _
    // Predicated region
    $region30: #{tpu_custom_call.1} parent=1 // pred_check
      _
    $region31: #{tpu_custom_call.1} parent=1 // pred_check_branch
      %66 = sbr.rel (0) target = $region33
    $region32: #{tpu_custom_call.1} parent=1 // pred_region
      %68 = vsyncadd [#allocation9], 0
      %s69 = sshll.u32 %s7, 4
      %s70 = int_to_ptr.hbm [resolvable:$true] %s69
      %s71 = sshll.u32 [#allocation8], 4
      %s72 = int_to_ptr.vmem [resolvable:$true] %s71
      %77 = dma.hbm_to_vmem [thread:$0]  %s70, 1024, %s72, [#allocation9], 64, 64, 4
    $region33: #{tpu_custom_call.1} parent=1 // pred_fallthru
      _
    // Predicated region
    $region34: #{tpu_custom_call.1} parent=1 // pred_check
      _
    $region35: #{tpu_custom_call.1} parent=1 // pred_check_branch
      %79 = sbr.rel (0) target = $region37
    $region36: #{tpu_custom_call.1} parent=1 // pred_region
      _
    $region37: #{tpu_custom_call.1} parent=1 // pred_fallthru
      _
    // Predicated region
    $region38: #{tpu_custom_call.1} parent=1 // pred_check
      _
    $region39: #{tpu_custom_call.1} parent=1 // pred_check_branch
      %81 = sbr.rel (0) target = $region41
    $region40: #{tpu_custom_call.1} parent=1 // pred_region
      %83 = dma.done [#allocation3], 2048
    $region41: #{tpu_custom_call.1} parent=1 // pred_fallthru
      _
    // Predicated region
    $region42: #{tpu_custom_call.1} parent=1 // pred_check
      _
    $region43: #{tpu_custom_call.1} parent=1 // pred_check_branch
      %85 = sbr.rel (0) target = $region45
    $region44: #{tpu_custom_call.1} parent=1 // pred_region
      %87 = dma.done [#allocation6], 8192
    $region45: #{tpu_custom_call.1} parent=1 // pred_fallthru
      _
    // Predicated region
    $region46: #{tpu_custom_call.1} parent=1 // pred_check
      _
    $region47: #{tpu_custom_call.1} parent=1 // pred_check_branch
      %89 = sbr.rel (0) target = $region49
    $region48: #{tpu_custom_call.1} parent=1 // pred_region
      %91 = dma.done [#allocation6], 1024
    $region49: #{tpu_custom_call.1} parent=1 // pred_fallthru
      _
    // Predicated region
    $region50: #{tpu_custom_call.1} parent=1 // pred_check
      _
    $region51: #{tpu_custom_call.1} parent=1 // pred_check_branch
      %93 = sbr.rel (0) target = $region53
    $region52: #{tpu_custom_call.1} parent=1 // pred_region
      %95 = dma.done [#allocation9], 1024
    $region53: #{tpu_custom_call.1} parent=1 // pred_fallthru
      _
    %v96 = vld [vmem:[#allocation2] sm:$0xff]
    %v97 = vld [vmem:[#allocation2 + $0x8] sm:$0xff]
    %v98 = vld [vmem:[#allocation2 + $0x10] sm:$0xff]
    %v99 = vld [vmem:[#allocation2 + $0x18] sm:$0xff]
    %v100 = vld [vmem:[#allocation2 + $0x20] sm:$0xff]
    %v101 = vld [vmem:[#allocation2 + $0x28] sm:$0xff]
    %v102 = vld [vmem:[#allocation2 + $0x30] sm:$0xff]
    %v103 = vld [vmem:[#allocation2 + $0x38] sm:$0xff]
    %v104 = vld [vmem:[#allocation2 + $0x40] sm:$0xff]
    %v105 = vld [vmem:[#allocation2 + $0x48] sm:$0xff]
    %v106 = vld [vmem:[#allocation2 + $0x50] sm:$0xff]
    %v107 = vld [vmem:[#allocation2 + $0x58] sm:$0xff]
    %v108 = vld [vmem:[#allocation2 + $0x60] sm:$0xff]
    %v109 = vld [vmem:[#allocation2 + $0x68] sm:$0xff]
    %v110 = vld [vmem:[#allocation2 + $0x70] sm:$0xff]
    %v111 = vld [vmem:[#allocation2 + $0x78] sm:$0xff]
    %v112 = vpack.c.bf16 %v104, %v96
    %v113 = vpack.c.bf16 %v105, %v97
    %v114 = vpack.c.bf16 %v106, %v98
    %v115 = vpack.c.bf16 %v107, %v99
    %v116 = vpack.c.bf16 %v108, %v100
    %v117 = vpack.c.bf16 %v109, %v101
    %v118 = vpack.c.bf16 %v110, %v102
    %v119 = vpack.c.bf16 %v111, %v103
    %v120 = vld [vmem:[#allocation5] sm:$0xf]
    %v121 = vld [vmem:[#allocation5 + $0x4] sm:$0xf]
    %v122 = vld [vmem:[#allocation5 + $0x8] sm:$0xf]
    %v123 = vld [vmem:[#allocation5 + $0xc] sm:$0xf]
    %v124 = vld [vmem:[#allocation5 + $0x10] sm:$0xf]
    %v125 = vld [vmem:[#allocation5 + $0x14] sm:$0xf]
    %v126 = vld [vmem:[#allocation5 + $0x18] sm:$0xf]
    %v127 = vld [vmem:[#allocation5 + $0x1c] sm:$0xf]
    %v128 = vld [vmem:[#allocation5 + $0x20] sm:$0xf]
    %v129 = vld [vmem:[#allocation5 + $0x24] sm:$0xf]
    %v130 = vld [vmem:[#allocation5 + $0x28] sm:$0xf]
    %v131 = vld [vmem:[#allocation5 + $0x2c] sm:$0xf]
    %v132 = vld [vmem:[#allocation5 + $0x30] sm:$0xf]
    %v133 = vld [vmem:[#allocation5 + $0x34] sm:$0xf]
    %v134 = vld [vmem:[#allocation5 + $0x38] sm:$0xf]
    %v135 = vld [vmem:[#allocation5 + $0x3c] sm:$0xf]
    %v136 = vld [vmem:[#allocation5 + $0x40] sm:$0xf]
    %v137 = vld [vmem:[#allocation5 + $0x44] sm:$0xf]
    %v138 = vld [vmem:[#allocation5 + $0x48] sm:$0xf]
    %v139 = vld [vmem:[#allocation5 + $0x4c] sm:$0xf]
    %v140 = vld [vmem:[#allocation5 + $0x50] sm:$0xf]
    %v141 = vld [vmem:[#allocation5 + $0x54] sm:$0xf]
    %v142 = vld [vmem:[#allocation5 + $0x58] sm:$0xf]
    %v143 = vld [vmem:[#allocation5 + $0x5c] sm:$0xf]
    %v144 = vld [vmem:[#allocation5 + $0x60] sm:$0xf]
    %v145 = vld [vmem:[#allocation5 + $0x64] sm:$0xf]
    %v146 = vld [vmem:[#allocation5 + $0x68] sm:$0xf]
    %v147 = vld [vmem:[#allocation5 + $0x6c] sm:$0xf]
    %v148 = vld [vmem:[#allocation5 + $0x70] sm:$0xf]
    %v149 = vld [vmem:[#allocation5 + $0x74] sm:$0xf]
    %v150 = vld [vmem:[#allocation5 + $0x78] sm:$0xf]
    %v151 = vld [vmem:[#allocation5 + $0x7c] sm:$0xf]
    %v152 = vld [vmem:[#allocation5 + $0x80] sm:$0xf]
    %v153 = vld [vmem:[#allocation5 + $0x84] sm:$0xf]
    %v154 = vld [vmem:[#allocation5 + $0x88] sm:$0xf]
    %v155 = vld [vmem:[#allocation5 + $0x8c] sm:$0xf]
    %v156 = vld [vmem:[#allocation5 + $0x90] sm:$0xf]
    %v157 = vld [vmem:[#allocation5 + $0x94] sm:$0xf]
    %v158 = vld [vmem:[#allocation5 + $0x98] sm:$0xf]
    %v159 = vld [vmem:[#allocation5 + $0x9c] sm:$0xf]
    %v160 = vld [vmem:[#allocation5 + $0xa0] sm:$0xf]
    %v161 = vld [vmem:[#allocation5 + $0xa4] sm:$0xf]
    %v162 = vld [vmem:[#allocation5 + $0xa8] sm:$0xf]
    %v163 = vld [vmem:[#allocation5 + $0xac] sm:$0xf]
    %v164 = vld [vmem:[#allocation5 + $0xb0] sm:$0xf]
    %v165 = vld [vmem:[#allocation5 + $0xb4] sm:$0xf]
    %v166 = vld [vmem:[#allocation5 + $0xb8] sm:$0xf]
    %v167 = vld [vmem:[#allocation5 + $0xbc] sm:$0xf]
    %v168 = vld [vmem:[#allocation5 + $0xc0] sm:$0xf]
    %v169 = vld [vmem:[#allocation5 + $0xc4] sm:$0xf]
    %v170 = vld [vmem:[#allocation5 + $0xc8] sm:$0xf]
    %v171 = vld [vmem:[#allocation5 + $0xcc] sm:$0xf]
    %v172 = vld [vmem:[#allocation5 + $0xd0] sm:$0xf]
    %v173 = vld [vmem:[#allocation5 + $0xd4] sm:$0xf]
    %v174 = vld [vmem:[#allocation5 + $0xd8] sm:$0xf]
    %v175 = vld [vmem:[#allocation5 + $0xdc] sm:$0xf]
    %v176 = vld [vmem:[#allocation5 + $0xe0] sm:$0xf]
    %v177 = vld [vmem:[#allocation5 + $0xe4] sm:$0xf]
    %v178 = vld [vmem:[#allocation5 + $0xe8] sm:$0xf]
    %v179 = vld [vmem:[#allocation5 + $0xec] sm:$0xf]
    %v180 = vld [vmem:[#allocation5 + $0xf0] sm:$0xf]
    %v181 = vld [vmem:[#allocation5 + $0xf4] sm:$0xf]
    %v182 = vld [vmem:[#allocation5 + $0xf8] sm:$0xf]
    %v183 = vld [vmem:[#allocation5 + $0xfc] sm:$0xf]
    %v184 = vld [vmem:[#allocation5 + $0x100] sm:$0xf]
    %v185 = vld [vmem:[#allocation5 + $0x104] sm:$0xf]
    %v186 = vld [vmem:[#allocation5 + $0x108] sm:$0xf]
    %v187 = vld [vmem:[#allocation5 + $0x10c] sm:$0xf]
    %v188 = vld [vmem:[#allocation5 + $0x110] sm:$0xf]
    %v189 = vld [vmem:[#allocation5 + $0x114] sm:$0xf]
    %v190 = vld [vmem:[#allocation5 + $0x118] sm:$0xf]
    %v191 = vld [vmem:[#allocation5 + $0x11c] sm:$0xf]
    %v192 = vld [vmem:[#allocation5 + $0x120] sm:$0xf]
    %v193 = vld [vmem:[#allocation5 + $0x124] sm:$0xf]
    %v194 = vld [vmem:[#allocation5 + $0x128] sm:$0xf]
    %v195 = vld [vmem:[#allocation5 + $0x12c] sm:$0xf]
    %v196 = vld [vmem:[#allocation5 + $0x130] sm:$0xf]
    %v197 = vld [vmem:[#allocation5 + $0x134] sm:$0xf]
    %v198 = vld [vmem:[#allocation5 + $0x138] sm:$0xf]
    %v199 = vld [vmem:[#allocation5 + $0x13c] sm:$0xf]
    %v200 = vld [vmem:[#allocation5 + $0x140] sm:$0xf]
    %v201 = vld [vmem:[#allocation5 + $0x144] sm:$0xf]
    %v202 = vld [vmem:[#allocation5 + $0x148] sm:$0xf]
    %v203 = vld [vmem:[#allocation5 + $0x14c] sm:$0xf]
    %v204 = vld [vmem:[#allocation5 + $0x150] sm:$0xf]
    %v205 = vld [vmem:[#allocation5 + $0x154] sm:$0xf]
    %v206 = vld [vmem:[#allocation5 + $0x158] sm:$0xf]
    %v207 = vld [vmem:[#allocation5 + $0x15c] sm:$0xf]
    %v208 = vld [vmem:[#allocation5 + $0x160] sm:$0xf]
    %v209 = vld [vmem:[#allocation5 + $0x164] sm:$0xf]
    %v210 = vld [vmem:[#allocation5 + $0x168] sm:$0xf]
    %v211 = vld [vmem:[#allocation5 + $0x16c] sm:$0xf]
    %v212 = vld [vmem:[#allocation5 + $0x170] sm:$0xf]
    %v213 = vld [vmem:[#allocation5 + $0x174] sm:$0xf]
    %v214 = vld [vmem:[#allocation5 + $0x178] sm:$0xf]
    %v215 = vld [vmem:[#allocation5 + $0x17c] sm:$0xf]
    %v216 = vld [vmem:[#allocation5 + $0x180] sm:$0xf]
    %v217 = vld [vmem:[#allocation5 + $0x184] sm:$0xf]
    %v218 = vld [vmem:[#allocation5 + $0x188] sm:$0xf]
    %v219 = vld [vmem:[#allocation5 + $0x18c] sm:$0xf]
    %v220 = vld [vmem:[#allocation5 + $0x190] sm:$0xf]
    %v221 = vld [vmem:[#allocation5 + $0x194] sm:$0xf]
    %v222 = vld [vmem:[#allocation5 + $0x198] sm:$0xf]
    %v223 = vld [vmem:[#allocation5 + $0x19c] sm:$0xf]
    %v224 = vld [vmem:[#allocation5 + $0x1a0] sm:$0xf]
    %v225 = vld [vmem:[#allocation5 + $0x1a4] sm:$0xf]
    %v226 = vld [vmem:[#allocation5 + $0x1a8] sm:$0xf]
    %v227 = vld [vmem:[#allocation5 + $0x1ac] sm:$0xf]
    %v228 = vld [vmem:[#allocation5 + $0x1b0] sm:$0xf]
    %v229 = vld [vmem:[#allocation5 + $0x1b4] sm:$0xf]
    %v230 = vld [vmem:[#allocation5 + $0x1b8] sm:$0xf]
    %v231 = vld [vmem:[#allocation5 + $0x1bc] sm:$0xf]
    %v232 = vld [vmem:[#allocation5 + $0x1c0] sm:$0xf]
    %v233 = vld [vmem:[#allocation5 + $0x1c4] sm:$0xf]
    %v234 = vld [vmem:[#allocation5 + $0x1c8] sm:$0xf]
    %v235 = vld [vmem:[#allocation5 + $0x1cc] sm:$0xf]
    %v236 = vld [vmem:[#allocation5 + $0x1d0] sm:$0xf]
    %v237 = vld [vmem:[#allocation5 + $0x1d4] sm:$0xf]
    %v238 = vld [vmem:[#allocation5 + $0x1d8] sm:$0xf]
    %v239 = vld [vmem:[#allocation5 + $0x1dc] sm:$0xf]
    %v240 = vld [vmem:[#allocation5 + $0x1e0] sm:$0xf]
    %v241 = vld [vmem:[#allocation5 + $0x1e4] sm:$0xf]
    %v242 = vld [vmem:[#allocation5 + $0x1e8] sm:$0xf]
    %v243 = vld [vmem:[#allocation5 + $0x1ec] sm:$0xf]
    %v244 = vld [vmem:[#allocation5 + $0x1f0] sm:$0xf]
    %v245 = vld [vmem:[#allocation5 + $0x1f4] sm:$0xf]
    %v246 = vld [vmem:[#allocation5 + $0x1f8] sm:$0xf]
    %v247 = vld [vmem:[#allocation5 + $0x1fc] sm:$0xf]
    %v376 = vunpack.c.l.b16 %v120
    %v377 = vunpack.c.l.b16 %v121
    %v378 = vunpack.c.l.b16 %v122
    %v379 = vunpack.c.l.b16 %v123
    %v380 = vunpack.c.l.b16 %v124
    %v381 = vunpack.c.l.b16 %v125
    %v382 = vunpack.c.l.b16 %v126
    %v383 = vunpack.c.l.b16 %v127
    %v384 = vunpack.c.l.b16 %v128
    %v385 = vunpack.c.l.b16 %v129
    %v386 = vunpack.c.l.b16 %v130
    %v387 = vunpack.c.l.b16 %v131
    %v388 = vunpack.c.l.b16 %v132
    %v389 = vunpack.c.l.b16 %v133
    %v390 = vunpack.c.l.b16 %v134
    %v391 = vunpack.c.l.b16 %v135
    %v392 = vunpack.c.l.b16 %v136
    %v393 = vunpack.c.l.b16 %v137
    %v394 = vunpack.c.l.b16 %v138
    %v395 = vunpack.c.l.b16 %v139
    %v396 = vunpack.c.l.b16 %v140
    %v397 = vunpack.c.l.b16 %v141
    %v398 = vunpack.c.l.b16 %v142
    %v399 = vunpack.c.l.b16 %v143
    %v400 = vunpack.c.l.b16 %v144
    %v401 = vunpack.c.l.b16 %v145
    %v402 = vunpack.c.l.b16 %v146
    %v403 = vunpack.c.l.b16 %v147
    %v404 = vunpack.c.l.b16 %v148
    %v405 = vunpack.c.l.b16 %v149
    %v406 = vunpack.c.l.b16 %v150
    %v407 = vunpack.c.l.b16 %v151
    %v408 = vunpack.c.l.b16 %v152
    %v409 = vunpack.c.l.b16 %v153
    %v410 = vunpack.c.l.b16 %v154
    %v411 = vunpack.c.l.b16 %v155
    %v412 = vunpack.c.l.b16 %v156
    %v413 = vunpack.c.l.b16 %v157
    %v414 = vunpack.c.l.b16 %v158
    %v415 = vunpack.c.l.b16 %v159
    %v416 = vunpack.c.l.b16 %v160
    %v417 = vunpack.c.l.b16 %v161
    %v418 = vunpack.c.l.b16 %v162
    %v419 = vunpack.c.l.b16 %v163
    %v420 = vunpack.c.l.b16 %v164
    %v421 = vunpack.c.l.b16 %v165
    %v422 = vunpack.c.l.b16 %v166
    %v423 = vunpack.c.l.b16 %v167
    %v424 = vunpack.c.l.b16 %v168
    %v425 = vunpack.c.l.b16 %v169
    %v426 = vunpack.c.l.b16 %v170
    %v427 = vunpack.c.l.b16 %v171
    %v428 = vunpack.c.l.b16 %v172
    %v429 = vunpack.c.l.b16 %v173
    %v430 = vunpack.c.l.b16 %v174
    %v431 = vunpack.c.l.b16 %v175
    %v432 = vunpack.c.l.b16 %v176
    %v433 = vunpack.c.l.b16 %v177
    %v434 = vunpack.c.l.b16 %v178
    %v435 = vunpack.c.l.b16 %v179
    %v436 = vunpack.c.l.b16 %v180
    %v437 = vunpack.c.l.b16 %v181
    %v438 = vunpack.c.l.b16 %v182
    %v439 = vunpack.c.l.b16 %v183
    %v440 = vunpack.c.l.b16 %v184
    %v441 = vunpack.c.l.b16 %v185
    %v442 = vunpack.c.l.b16 %v186
    %v443 = vunpack.c.l.b16 %v187
    %v444 = vunpack.c.l.b16 %v188
    %v445 = vunpack.c.l.b16 %v189
    %v446 = vunpack.c.l.b16 %v190
    %v447 = vunpack.c.l.b16 %v191
    %v448 = vunpack.c.l.b16 %v192
    %v449 = vunpack.c.l.b16 %v193
    %v450 = vunpack.c.l.b16 %v194
    %v451 = vunpack.c.l.b16 %v195
    %v452 = vunpack.c.l.b16 %v196
    %v453 = vunpack.c.l.b16 %v197
    %v454 = vunpack.c.l.b16 %v198
    %v455 = vunpack.c.l.b16 %v199
    %v456 = vunpack.c.l.b16 %v200
    %v457 = vunpack.c.l.b16 %v201
    %v458 = vunpack.c.l.b16 %v202
    %v459 = vunpack.c.l.b16 %v203
    %v460 = vunpack.c.l.b16 %v204
    %v461 = vunpack.c.l.b16 %v205
    %v462 = vunpack.c.l.b16 %v206
    %v463 = vunpack.c.l.b16 %v207
    %v464 = vunpack.c.l.b16 %v208
    %v465 = vunpack.c.l.b16 %v209
    %v466 = vunpack.c.l.b16 %v210
    %v467 = vunpack.c.l.b16 %v211
    %v468 = vunpack.c.l.b16 %v212
    %v469 = vunpack.c.l.b16 %v213
    %v470 = vunpack.c.l.b16 %v214
    %v471 = vunpack.c.l.b16 %v215
    %v472 = vunpack.c.l.b16 %v216
    %v473 = vunpack.c.l.b16 %v217
    %v474 = vunpack.c.l.b16 %v218
    %v475 = vunpack.c.l.b16 %v219
    %v476 = vunpack.c.l.b16 %v220
    %v477 = vunpack.c.l.b16 %v221
    %v478 = vunpack.c.l.b16 %v222
    %v479 = vunpack.c.l.b16 %v223
    %v480 = vunpack.c.l.b16 %v224
    %v481 = vunpack.c.l.b16 %v225
    %v482 = vunpack.c.l.b16 %v226
    %v483 = vunpack.c.l.b16 %v227
    %v484 = vunpack.c.l.b16 %v228
    %v485 = vunpack.c.l.b16 %v229
    %v486 = vunpack.c.l.b16 %v230
    %v487 = vunpack.c.l.b16 %v231
    %v488 = vunpack.c.l.b16 %v232
    %v489 = vunpack.c.l.b16 %v233
    %v490 = vunpack.c.l.b16 %v234
    %v491 = vunpack.c.l.b16 %v235
    %v492 = vunpack.c.l.b16 %v236
    %v493 = vunpack.c.l.b16 %v237
    %v494 = vunpack.c.l.b16 %v238
    %v495 = vunpack.c.l.b16 %v239
    %v496 = vunpack.c.l.b16 %v240
    %v497 = vunpack.c.l.b16 %v241
    %v498 = vunpack.c.l.b16 %v242
    %v499 = vunpack.c.l.b16 %v243
    %v500 = vunpack.c.l.b16 %v244
    %v501 = vunpack.c.l.b16 %v245
    %v502 = vunpack.c.l.b16 %v246
    %v503 = vunpack.c.l.b16 %v247
    %v504 = vpack.c.b16 %v377, %v376
    %v505 = vpack.c.b16 %v379, %v378
    %v506 = vpack.c.b16 %v381, %v380
    %v507 = vpack.c.b16 %v383, %v382
    %v508 = vpack.c.b16 %v385, %v384
    %v509 = vpack.c.b16 %v387, %v386
    %v510 = vpack.c.b16 %v389, %v388
    %v511 = vpack.c.b16 %v391, %v390
    %v512 = vpack.c.b16 %v393, %v392
    %v513 = vpack.c.b16 %v395, %v394
    %v514 = vpack.c.b16 %v397, %v396
    %v515 = vpack.c.b16 %v399, %v398
    %v516 = vpack.c.b16 %v401, %v400
    %v517 = vpack.c.b16 %v403, %v402
    %v518 = vpack.c.b16 %v405, %v404
    %v519 = vpack.c.b16 %v407, %v406
    %v520 = vpack.c.b16 %v409, %v408
    %v521 = vpack.c.b16 %v411, %v410
    %v522 = vpack.c.b16 %v413, %v412
    %v523 = vpack.c.b16 %v415, %v414
    %v524 = vpack.c.b16 %v417, %v416
    %v525 = vpack.c.b16 %v419, %v418
    %v526 = vpack.c.b16 %v421, %v420
    %v527 = vpack.c.b16 %v423, %v422
    %v528 = vpack.c.b16 %v425, %v424
    %v529 = vpack.c.b16 %v427, %v426
    %v530 = vpack.c.b16 %v429, %v428
    %v531 = vpack.c.b16 %v431, %v430
    %v532 = vpack.c.b16 %v433, %v432
    %v533 = vpack.c.b16 %v435, %v434
    %v534 = vpack.c.b16 %v437, %v436
    %v535 = vpack.c.b16 %v439, %v438
    %v536 = vpack.c.b16 %v441, %v440
    %v537 = vpack.c.b16 %v443, %v442
    %v538 = vpack.c.b16 %v445, %v444
    %v539 = vpack.c.b16 %v447, %v446
    %v540 = vpack.c.b16 %v449, %v448
    %v541 = vpack.c.b16 %v451, %v450
    %v542 = vpack.c.b16 %v453, %v452
    %v543 = vpack.c.b16 %v455, %v454
    %v544 = vpack.c.b16 %v457, %v456
    %v545 = vpack.c.b16 %v459, %v458
    %v546 = vpack.c.b16 %v461, %v460
    %v547 = vpack.c.b16 %v463, %v462
    %v548 = vpack.c.b16 %v465, %v464
    %v549 = vpack.c.b16 %v467, %v466
    %v550 = vpack.c.b16 %v469, %v468
    %v551 = vpack.c.b16 %v471, %v470
    %v552 = vpack.c.b16 %v473, %v472
    %v553 = vpack.c.b16 %v475, %v474
    %v554 = vpack.c.b16 %v477, %v476
    %v555 = vpack.c.b16 %v479, %v478
    %v556 = vpack.c.b16 %v481, %v480
    %v557 = vpack.c.b16 %v483, %v482
    %v558 = vpack.c.b16 %v485, %v484
    %v559 = vpack.c.b16 %v487, %v486
    %v560 = vpack.c.b16 %v489, %v488
    %v561 = vpack.c.b16 %v491, %v490
    %v562 = vpack.c.b16 %v493, %v492
    %v563 = vpack.c.b16 %v495, %v494
    %v564 = vpack.c.b16 %v497, %v496
    %v565 = vpack.c.b16 %v499, %v498
    %v566 = vpack.c.b16 %v501, %v500
    %v567 = vpack.c.b16 %v503, %v502
    %632 = vmatpush.bf16.msra.mxu0 %v511
    %633 = vmatpush.bf16.msra.mxu0 %v510
    %634 = vmatpush.bf16.msra.mxu0 %v509
    %635 = vmatpush.bf16.msra.mxu0 %v508
    %636 = vmatpush.bf16.msra.mxu0 %v507
    %637 = vmatpush.bf16.msra.mxu0 %v506
    %638 = vmatpush.bf16.msra.mxu0 %v505
    %639 = vmatpush.bf16.msra.mxu0 %v504
    %640 = vmatmul.bf16.gmra.mxu0 %v112
    %v641 = vpop.f32.mrf.mxu0
    %v642 = vadd.f32 0.0, %v641
    %v643 = vpop.f32.mrf.mxu0
    %v644 = vadd.f32 0.0, %v643
    %645 = vdwg.mxu0
    %646 = vmatpush.bf16.msra.mxu0 %v519
    %647 = vmatpush.bf16.msra.mxu0 %v518
    %648 = vmatpush.bf16.msra.mxu0 %v517
    %649 = vmatpush.bf16.msra.mxu0 %v516
    %650 = vmatpush.bf16.msra.mxu0 %v515
    %651 = vmatpush.bf16.msra.mxu0 %v514
    %652 = vmatpush.bf16.msra.mxu0 %v513
    %653 = vmatpush.bf16.msra.mxu0 %v512
    %654 = vmatmul.bf16.gmra.mxu0 %v113
    %v655 = vpop.f32.mrf.mxu0
    %v656 = vadd.f32 %v642, %v655
    %v657 = vpop.f32.mrf.mxu0
    %v658 = vadd.f32 %v644, %v657
    %659 = vdwg.mxu0
    %660 = vmatpush.bf16.msra.mxu0 %v527
    %661 = vmatpush.bf16.msra.mxu0 %v526
    %662 = vmatpush.bf16.msra.mxu0 %v525
    %663 = vmatpush.bf16.msra.mxu0 %v524
    %664 = vmatpush.bf16.msra.mxu0 %v523
    %665 = vmatpush.bf16.msra.mxu0 %v522
    %666 = vmatpush.bf16.msra.mxu0 %v521
    %667 = vmatpush.bf16.msra.mxu0 %v520
    %668 = vmatmul.bf16.gmra.mxu0 %v114
    %v669 = vpop.f32.mrf.mxu0
    %v670 = vadd.f32 %v656, %v669
    %v671 = vpop.f32.mrf.mxu0
    %v672 = vadd.f32 %v658, %v671
    %673 = vdwg.mxu0
    %674 = vmatpush.bf16.msra.mxu0 %v535
    %675 = vmatpush.bf16.msra.mxu0 %v534
    %676 = vmatpush.bf16.msra.mxu0 %v533
    %677 = vmatpush.bf16.msra.mxu0 %v532
    %678 = vmatpush.bf16.msra.mxu0 %v531
    %679 = vmatpush.bf16.msra.mxu0 %v530
    %680 = vmatpush.bf16.msra.mxu0 %v529
    %681 = vmatpush.bf16.msra.mxu0 %v528
    %682 = vmatmul.bf16.gmra.mxu0 %v115
    %v683 = vpop.f32.mrf.mxu0
    %v684 = vadd.f32 %v670, %v683
    %v685 = vpop.f32.mrf.mxu0
    %v686 = vadd.f32 %v672, %v685
    %687 = vdwg.mxu0
    %688 = vmatpush.bf16.msra.mxu0 %v543
    %689 = vmatpush.bf16.msra.mxu0 %v542
    %690 = vmatpush.bf16.msra.mxu0 %v541
    %691 = vmatpush.bf16.msra.mxu0 %v540
    %692 = vmatpush.bf16.msra.mxu0 %v539
    %693 = vmatpush.bf16.msra.mxu0 %v538
    %694 = vmatpush.bf16.msra.mxu0 %v537
    %695 = vmatpush.bf16.msra.mxu0 %v536
    %696 = vmatmul.bf16.gmra.mxu0 %v116
    %v697 = vpop.f32.mrf.mxu0
    %v698 = vadd.f32 %v684, %v697
    %v699 = vpop.f32.mrf.mxu0
    %v700 = vadd.f32 %v686, %v699
    %701 = vdwg.mxu0
    %702 = vmatpush.bf16.msra.mxu0 %v551
    %703 = vmatpush.bf16.msra.mxu0 %v550
    %704 = vmatpush.bf16.msra.mxu0 %v549
    %705 = vmatpush.bf16.msra.mxu0 %v548
    %706 = vmatpush.bf16.msra.mxu0 %v547
    %707 = vmatpush.bf16.msra.mxu0 %v546
    %708 = vmatpush.bf16.msra.mxu0 %v545
    %709 = vmatpush.bf16.msra.mxu0 %v544
    %710 = vmatmul.bf16.gmra.mxu0 %v117
    %v711 = vpop.f32.mrf.mxu0
    %v712 = vadd.f32 %v698, %v711
    %v713 = vpop.f32.mrf.mxu0
    %v714 = vadd.f32 %v700, %v713
    %715 = vdwg.mxu0
    %716 = vmatpush.bf16.msra.mxu0 %v559
    %717 = vmatpush.bf16.msra.mxu0 %v558
    %718 = vmatpush.bf16.msra.mxu0 %v557
    %719 = vmatpush.bf16.msra.mxu0 %v556
    %720 = vmatpush.bf16.msra.mxu0 %v555
    %721 = vmatpush.bf16.msra.mxu0 %v554
    %722 = vmatpush.bf16.msra.mxu0 %v553
    %723 = vmatpush.bf16.msra.mxu0 %v552
    %724 = vmatmul.bf16.gmra.mxu0 %v118
    %v725 = vpop.f32.mrf.mxu0
    %v726 = vadd.f32 %v712, %v725
    %v727 = vpop.f32.mrf.mxu0
    %v728 = vadd.f32 %v714, %v727
    %729 = vdwg.mxu0
    %730 = vmatpush.bf16.msra.mxu0 %v567
    %731 = vmatpush.bf16.msra.mxu0 %v566
    %732 = vmatpush.bf16.msra.mxu0 %v565
    %733 = vmatpush.bf16.msra.mxu0 %v564
    %734 = vmatpush.bf16.msra.mxu0 %v563
    %735 = vmatpush.bf16.msra.mxu0 %v562
    %736 = vmatpush.bf16.msra.mxu0 %v561
    %737 = vmatpush.bf16.msra.mxu0 %v560
    %738 = vmatmul.bf16.gmra.mxu0 %v119
    %v739 = vpop.f32.mrf.mxu0
    %v740 = vadd.f32 %v726, %v739
    %v741 = vpop.f32.mrf.mxu0
    %v742 = vadd.f32 %v728, %v741
    %743 = vdwg.mxu0
    %v744 = vld [vmem:[%s2] sm:$0x1]
    %v746 = vperm.slane %v744, 0
    %v748 = vmul.f32 %v740, %v746
    %v749 = vmul.f32 %v742, %v746
    %v750 = vld [vmem:[%s3] sm:$0x1]
    %v752 = vperm.slane %v750, 0
    %v754 = vadd.f32 %v748, %v752
    %v755 = vadd.f32 %v749, %v752
    %v756 = vmax.f32 %v754, 0.0
    %v757 = vmax.f32 %v755, 0.0
    %v758 = vpack.c.bf16 %v757, %v756
    %v759 = vld [vmem:[#allocation7] sm:$0xf]
    %v760 = vld [vmem:[#allocation7 + $0x4] sm:$0xf]
    %v761 = vld [vmem:[#allocation7 + $0x8] sm:$0xf]
    %v762 = vld [vmem:[#allocation7 + $0xc] sm:$0xf]
    %v763 = vld [vmem:[#allocation7 + $0x10] sm:$0xf]
    %v764 = vld [vmem:[#allocation7 + $0x14] sm:$0xf]
    %v765 = vld [vmem:[#allocation7 + $0x18] sm:$0xf]
    %v766 = vld [vmem:[#allocation7 + $0x1c] sm:$0xf]
    %v767 = vld [vmem:[#allocation7 + $0x20] sm:$0xf]
    %v768 = vld [vmem:[#allocation7 + $0x24] sm:$0xf]
    %v769 = vld [vmem:[#allocation7 + $0x28] sm:$0xf]
    %v770 = vld [vmem:[#allocation7 + $0x2c] sm:$0xf]
    %v771 = vld [vmem:[#allocation7 + $0x30] sm:$0xf]
    %v772 = vld [vmem:[#allocation7 + $0x34] sm:$0xf]
    %v773 = vld [vmem:[#allocation7 + $0x38] sm:$0xf]
    %v774 = vld [vmem:[#allocation7 + $0x3c] sm:$0xf]
    %v791 = vunpack.c.l.b16 %v759
    %v792 = vunpack.c.l.b16 %v760
    %v793 = vunpack.c.l.b16 %v761
    %v794 = vunpack.c.l.b16 %v762
    %v795 = vunpack.c.l.b16 %v763
    %v796 = vunpack.c.l.b16 %v764
    %v797 = vunpack.c.l.b16 %v765
    %v798 = vunpack.c.l.b16 %v766
    %v799 = vunpack.c.l.b16 %v767
    %v800 = vunpack.c.l.b16 %v768
    %v801 = vunpack.c.l.b16 %v769
    %v802 = vunpack.c.l.b16 %v770
    %v803 = vunpack.c.l.b16 %v771
    %v804 = vunpack.c.l.b16 %v772
    %v805 = vunpack.c.l.b16 %v773
    %v806 = vunpack.c.l.b16 %v774
    %v807 = vpack.c.b16 %v792, %v791
    %v808 = vpack.c.b16 %v794, %v793
    %v809 = vpack.c.b16 %v796, %v795
    %v810 = vpack.c.b16 %v798, %v797
    %v811 = vpack.c.b16 %v800, %v799
    %v812 = vpack.c.b16 %v802, %v801
    %v813 = vpack.c.b16 %v804, %v803
    %v814 = vpack.c.b16 %v806, %v805
    %823 = vmatpush.bf16.msra.mxu0 %v814
    %824 = vmatpush.bf16.msra.mxu0 %v813
    %825 = vmatpush.bf16.msra.mxu0 %v812
    %826 = vmatpush.bf16.msra.mxu0 %v811
    %827 = vmatpush.bf16.msra.mxu0 %v810
    %828 = vmatpush.bf16.msra.mxu0 %v809
    %829 = vmatpush.bf16.msra.mxu0 %v808
    %830 = vmatpush.bf16.msra.mxu0 %v807
    %831 = vmatmul.bf16.gmra.mxu0 %v758
    %v832 = vpop.f32.mrf.mxu0
    %v833 = vadd.f32 0.0, %v832
    %v834 = vpop.f32.mrf.mxu0
    %v835 = vadd.f32 0.0, %v834
    %836 = vdwg.mxu0
    %v837 = vld [vmem:[%s5] sm:$0x1]
    %v839 = vperm.slane %v837, 0
    %v841 = vmul.f32 %v833, %v839
    %v842 = vmul.f32 %v835, %v839
    %v843 = vld [vmem:[%s6] sm:$0x1]
    %v845 = vperm.slane %v843, 0
    %v847 = vadd.f32 %v841, %v845
    %v848 = vadd.f32 %v842, %v845
    %v849 = vmax.f32 %v847, 0.0
    %v850 = vmax.f32 %v848, 0.0
    %v851 = vpack.c.bf16 %v850, %v849
    %v852 = vld [vmem:[#allocation8] sm:$0xf]
    %v853 = vld [vmem:[#allocation8 + $0x4] sm:$0xf]
    %v854 = vld [vmem:[#allocation8 + $0x8] sm:$0xf]
    %v855 = vld [vmem:[#allocation8 + $0xc] sm:$0xf]
    %v856 = vld [vmem:[#allocation8 + $0x10] sm:$0xf]
    %v857 = vld [vmem:[#allocation8 + $0x14] sm:$0xf]
    %v858 = vld [vmem:[#allocation8 + $0x18] sm:$0xf]
    %v859 = vld [vmem:[#allocation8 + $0x1c] sm:$0xf]
    %v860 = vld [vmem:[#allocation8 + $0x20] sm:$0xf]
    %v861 = vld [vmem:[#allocation8 + $0x24] sm:$0xf]
    %v862 = vld [vmem:[#allocation8 + $0x28] sm:$0xf]
    %v863 = vld [vmem:[#allocation8 + $0x2c] sm:$0xf]
    %v864 = vld [vmem:[#allocation8 + $0x30] sm:$0xf]
    %v865 = vld [vmem:[#allocation8 + $0x34] sm:$0xf]
    %v866 = vld [vmem:[#allocation8 + $0x38] sm:$0xf]
    %v867 = vld [vmem:[#allocation8 + $0x3c] sm:$0xf]
    %v868 = vld [vmem:[%s8] sm:$0x1]
    %v870 = vperm.slane %v868, 0
    %v888 = vunpack.c.l.b16 %v852
    %v889 = vunpack.c.l.b16 %v853
    %v890 = vunpack.c.l.b16 %v854
    %v891 = vunpack.c.l.b16 %v855
    %v892 = vunpack.c.l.b16 %v856
    %v893 = vunpack.c.l.b16 %v857
    %v894 = vunpack.c.l.b16 %v858
    %v895 = vunpack.c.l.b16 %v859
    %v896 = vunpack.c.l.b16 %v860
    %v897 = vunpack.c.l.b16 %v861
    %v898 = vunpack.c.l.b16 %v862
    %v899 = vunpack.c.l.b16 %v863
    %v900 = vunpack.c.l.b16 %v864
    %v901 = vunpack.c.l.b16 %v865
    %v902 = vunpack.c.l.b16 %v866
    %v903 = vunpack.c.l.b16 %v867
    %v904 = vpack.c.b16 %v889, %v888
    %v905 = vpack.c.b16 %v891, %v890
    %v906 = vpack.c.b16 %v893, %v892
    %v907 = vpack.c.b16 %v895, %v894
    %v908 = vpack.c.b16 %v897, %v896
    %v909 = vpack.c.b16 %v899, %v898
    %v910 = vpack.c.b16 %v901, %v900
    %v911 = vpack.c.b16 %v903, %v902
    %920 = vmatpush.bf16.msra.mxu0 %v911
    %921 = vmatpush.bf16.msra.mxu0 %v910
    %922 = vmatpush.bf16.msra.mxu0 %v909
    %923 = vmatpush.bf16.msra.mxu0 %v908
    %924 = vmatpush.bf16.msra.mxu0 %v907
    %925 = vmatpush.bf16.msra.mxu0 %v906
    %926 = vmatpush.bf16.msra.mxu0 %v905
    %927 = vmatpush.bf16.msra.mxu0 %v904
    %928 = vmatmul.bf16.gmra.mxu0 %v851
    %v929 = vpop.f32.mrf.mxu0
    %v930 = vadd.f32 %v870, %v929
    %v931 = vpop.f32.mrf.mxu0
    %v932 = vadd.f32 %v870, %v931
    %933 = vdwg.mxu0
    %934 = vst [vmem:[#allocation10] sm:$0xff] %v930
    %935 = vst [vmem:[#allocation10 + $0x8] sm:$0xff] %v932
    // Predicated region
    $region54: #{tpu_custom_call.1} parent=1 // pred_check
      _
    $region55: #{tpu_custom_call.1} parent=1 // pred_check_branch
      %937 = sbr.rel (0) target = $region57
    $region56: #{tpu_custom_call.1} parent=1 // pred_region
      %939 = vsyncadd [#allocation4], 0
      %s940 = sshll.u32 [#allocation10], 4
      %s941 = int_to_ptr.vmem [resolvable:$true] %s940
      %s942 = sshll.u32 %s9, 4
      %s943 = int_to_ptr.hbm [resolvable:$true] %s942
      %948 = dma.vmem_to_hbm [thread:$0]  %s941, 256, %s943, [#allocation4], 128, 128, 8
    $region57: #{tpu_custom_call.1} parent=1 // pred_fallthru
      _
    // Predicated region
    $region58: #{tpu_custom_call.1} parent=1 // pred_check
      _
    $region59: #{tpu_custom_call.1} parent=1 // pred_check_branch
      %950 = sbr.rel (0) target = $region61
    $region60: #{tpu_custom_call.1} parent=1 // pred_region
      %952 = dma.done [#allocation4], 256
    $region61: #{tpu_custom_call.1} parent=1 // pred_fallthru
      _
    %953 = vsyncpa [#allocation3], 1
    %954 = vsyncpa [#allocation6], 1
    %955 = vsyncpa [#allocation9], 1
    %956 = vsyncpa [#allocation4], 1

// kernel: tpu_custom_call.1
$region0: #{tpu_custom_call.1}
  #allocation0 [shape = 'u32[]', space=smem, size = 0x4, offset = 0x4, fixed_abs, tag = 'smem constant byte address 0x4 - core index']
  #allocation1 [shape = 'u32[72,128]{1,0:T(1,128)}', space=vmem, size = 0x9000, scoped, tag = 'internal scratch']
  %s0 = inlined_call_operand.hbm [shape: f32[16,1024], index: 0, kind: input, shape index: {}]
  %s1 = inlined_call_operand.hbm [shape: bf16[1024,128], index: 1, kind: input, shape index: {}]
  %s2 = inlined_call_operand.vmem [shape: f32[1,128], index: 2, kind: input, shape index: {}]
  %s3 = inlined_call_operand.vmem [shape: f32[1,128], index: 3, kind: input, shape index: {}]
  %s4 = inlined_call_operand.hbm [shape: bf16[128,128], index: 4, kind: input, shape index: {}]
  %s5 = inlined_call_operand.vmem [shape: f32[1,128], index: 5, kind: input, shape index: {}]
  %s6 = inlined_call_operand.vmem [shape: f32[1,128], index: 6, kind: input, shape index: {}]
  %s7 = inlined_call_operand.hbm [shape: bf16[128,128], index: 7, kind: input, shape index: {}]
  %s8 = inlined_call_operand.vmem [shape: f32[1,128], index: 8, kind: input, shape index: {}]
  %s9 = inlined_call_operand.hbm [shape: f32[16,128], index: 9, kind: output, shape index: {}]
  %s10 = sld [smem:[#allocation0]]
  $region62: #{tpu_custom_call.1} parent=0
    _
  %s12 = ssub.s32 1, %s10
  %s13 = scalar_select 0, %s12, %s10
  $region1: #{tpu_custom_call.1} parent=0
    #allocation2 [shape = 'u8[65536]{0}', space=vmem, size = 0x10000, scoped, tag = 'input window, operand 0, single buffered']
    #allocation3 [shape = 's32[1]{0}', space=sflag, size = 0x4, scoped, tag = 'scoped memory for tpu_custom_call.1']
    #allocation4 [shape = 's32[1]{0}', space=sflag, size = 0x4, scoped, tag = 'scoped memory for tpu_custom_call.1']
    #allocation5 [shape = 'u8[262144]{0}', space=vmem, size = 0x40000, scoped, tag = 'input window, operand 1, single buffered']
    #allocation6 [shape = 's32[1]{0}', space=sflag, size = 0x4, scoped, tag = 'scoped memory for tpu_custom_call.1']
    #allocation7 [shape = 'u8[32768]{0}', space=vmem, size = 0x8000, scoped, tag = 'input window, operand 4, single buffered']
    #allocation8 [shape = 'u8[32768]{0}', space=vmem, size = 0x8000, scoped, tag = 'input window, operand 7, single buffered']
    #allocation9 [shape = 's32[1]{0}', space=sflag, size = 0x4, scoped, tag = 'scoped memory for tpu_custom_call.1']
    #allocation10 [shape = 'u8[8192]{0}', space=vmem, size = 0x2000, scoped, tag = 'output window, operand 0, single buffered']
    %14 = vsyncpa [#allocation3], 0
    %15 = vsyncpa [#allocation6], 0
    %16 = vsyncpa [#allocation9], 0
    %17 = vsyncpa [#allocation4], 0
    // Predicated region
    $region2: #{tpu_custom_call.1} parent=1 // pred_check
      _
    $region3: #{tpu_custom_call.1} parent=1 // pred_check_branch
      %19 = sbr.rel (0) target = $region5
    $region4: #{tpu_custom_call.1} parent=1 // pred_region
      %21 = vsyncadd [#allocation3], 0
      %s22 = sshll.u32 %s0, 4
      %s23 = int_to_ptr.hbm [resolvable:$true] %s22
      %s24 = sshll.u32 [#allocation2], 4
      %s25 = int_to_ptr.vmem [resolvable:$true] %s24
      %30 = dma.hbm_to_vmem [thread:$0]  %s23, 2048, %s25, [#allocation3], 1024, 1024, 64
    $region5: #{tpu_custom_call.1} parent=1 // pred_fallthru
      _
    // Predicated region
    $region6: #{tpu_custom_call.1} parent=1 // pred_check
      _
    $region7: #{tpu_custom_call.1} parent=1 // pred_check_branch
      %32 = sbr.rel (0) target = $region9
    $region8: #{tpu_custom_call.1} parent=1 // pred_region
      %34 = vsyncadd [#allocation6], 0
      %s35 = sshll.u32 %s1, 4
      %s36 = int_to_ptr.hbm [resolvable:$true] %s35
      %s37 = sshll.u32 [#allocation5], 4
      %s38 = int_to_ptr.vmem [resolvable:$true] %s37
      %43 = dma.hbm_to_vmem [thread:$0]  %s36, 8192, %s38, [#allocation6], 64, 64, 4
    $region9: #{tpu_custom_call.1} parent=1 // pred_fallthru
      _
    // Predicated region
    $region10: #{tpu_custom_call.1} parent=1 // pred_check
      _
    $region11: #{tpu_custom_call.1} parent=1 // pred_check_branch
      %45 = sbr.rel (0) target = $region13
    $region12: #{tpu_custom_call.1} parent=1 // pred_region
      _
    $region13: #{tpu_custom_call.1} parent=1 // pred_fallthru
      _
    // Predicated region
    $region14: #{tpu_custom_call.1} parent=1 // pred_check
      _
    $region15: #{tpu_custom_call.1} parent=1 // pred_check_branch
      %47 = sbr.rel (0) target = $region17
    $region16: #{tpu_custom_call.1} parent=1 // pred_region
      _
    $region17: #{tpu_custom_call.1} parent=1 // pred_fallthru
      _
    // Predicated region
    $region18: #{tpu_custom_call.1} parent=1 // pred_check
      _
    $region19: #{tpu_custom_call.1} parent=1 // pred_check_branch
      %49 = sbr.rel (0) target = $region21
    $region20: #{tpu_custom_call.1} parent=1 // pred_region
      %51 = vsyncadd [#allocation6], 0
      %s52 = sshll.u32 %s4, 4
      %s53 = int_to_ptr.hbm [resolvable:$true] %s52
      %s54 = sshll.u32 [#allocation7], 4
      %s55 = int_to_ptr.vmem [resolvable:$true] %s54
      %60 = dma.hbm_to_vmem [thread:$0]  %s53, 1024, %s55, [#allocation6], 64, 64, 4
    $region21: #{tpu_custom_call.1} parent=1 // pred_fallthru
      _
    // Predicated region
    $region22: #{tpu_custom_call.1} parent=1 // pred_check
      _
    $region23: #{tpu_custom_call.1} parent=1 // pred_check_branch
      %62 = sbr.rel (0) target = $region25
    $region24: #{tpu_custom_call.1} parent=1 // pred_region
      _
    $region25: #{tpu_custom_call.1} parent=1 // pred_fallthru
      _
    // Predicated region
    $region26: #{tpu_custom_call.1} parent=1 // pred_check
      _
    $region27: #{tpu_custom_call.1} parent=1 // pred_check_branch
      %64 = sbr.rel (0) target = $region29
    $region28: #{tpu_custom_call.1} parent=1 // pred_region
      _
    $region29: #{tpu_custom_call.1} parent=1 // pred_fallthru
      _
    // Predicated region
    $region30: #{tpu_custom_call.1} parent=1 // pred_check
      _
    $region31: #{tpu_custom_call.1} parent=1 // pred_check_branch
      %66 = sbr.rel (0) target = $region33
    $region32: #{tpu_custom_call.1} parent=1 // pred_region
      %68 = vsyncadd [#allocation9], 0
      %s69 = sshll.u32 %s7, 4
      %s70 = int_to_ptr.hbm [resolvable:$true] %s69
      %s71 = sshll.u32 [#allocation8], 4
      %s72 = int_to_ptr.vmem [resolvable:$true] %s71
      %77 = dma.hbm_to_vmem [thread:$0]  %s70, 1024, %s72, [#allocation9], 64, 64, 4
    $region33: #{tpu_custom_call.1} parent=1 // pred_fallthru
      _
    // Predicated region
    $region34: #{tpu_custom_call.1} parent=1 // pred_check
      _
    $region35: #{tpu_custom_call.1} parent=1 // pred_check_branch
      %79 = sbr.rel (0) target = $region37
    $region36: #{tpu_custom_call.1} parent=1 // pred_region
      _
    $region37: #{tpu_custom_call.1} parent=1 // pred_fallthru
      _
    // Predicated region
    $region38: #{tpu_custom_call.1} parent=1 // pred_check
      _
    $region39: #{tpu_custom_call.1} parent=1 // pred_check_branch
      %81 = sbr.rel (0) target = $region41
    $region40: #{tpu_custom_call.1} parent=1 // pred_region
      %83 = dma.done [#allocation3], 2048
    $region41: #{tpu_custom_call.1} parent=1 // pred_fallthru
      _
    // Predicated region
    $region42: #{tpu_custom_call.1} parent=1 // pred_check
      _
    $region43: #{tpu_custom_call.1} parent=1 // pred_check_branch
      %85 = sbr.rel (0) target = $region45
    $region44: #{tpu_custom_call.1} parent=1 // pred_region
      %87 = dma.done [#allocation6], 8192
    $region45: #{tpu_custom_call.1} parent=1 // pred_fallthru
      _
    // Predicated region
    $region46: #{tpu_custom_call.1} parent=1 // pred_check
      _
    $region47: #{tpu_custom_call.1} parent=1 // pred_check_branch
      %89 = sbr.rel (0) target = $region49
    $region48: #{tpu_custom_call.1} parent=1 // pred_region
      %91 = dma.done [#allocation6], 1024
    $region49: #{tpu_custom_call.1} parent=1 // pred_fallthru
      _
    // Predicated region
    $region50: #{tpu_custom_call.1} parent=1 // pred_check
      _
    $region51: #{tpu_custom_call.1} parent=1 // pred_check_branch
      %93 = sbr.rel (0) target = $region53
    $region52: #{tpu_custom_call.1} parent=1 // pred_region
      %95 = dma.done [#allocation9], 1024
    $region53: #{tpu_custom_call.1} parent=1 // pred_fallthru
      _
    %v96 = vld [vmem:[#allocation2] sm:$0xff]
    %v97 = vld [vmem:[#allocation2 + $0x8] sm:$0xff]
    %v98 = vld [vmem:[#allocation2 + $0x10] sm:$0xff]
    %v99 = vld [vmem:[#allocation2 + $0x18] sm:$0xff]
    %v100 = vld [vmem:[#allocation2 + $0x20] sm:$0xff]
    %v101 = vld [vmem:[#allocation2 + $0x28] sm:$0xff]
    %v102 = vld [vmem:[#allocation2 + $0x30] sm:$0xff]
    %v103 = vld [vmem:[#allocation2 + $0x38] sm:$0xff]
    %v104 = vld [vmem:[#allocation2 + $0x40] sm:$0xff]
    %v105 = vld [vmem:[#allocation2 + $0x48] sm:$0xff]
    %v106 = vld [vmem:[#allocation2 + $0x50] sm:$0xff]
    %v107 = vld [vmem:[#allocation2 + $0x58] sm:$0xff]
    %v108 = vld [vmem:[#allocation2 + $0x60] sm:$0xff]
    %v109 = vld [vmem:[#allocation2 + $0x68] sm:$0xff]
    %v110 = vld [vmem:[#allocation2 + $0x70] sm:$0xff]
    %v111 = vld [vmem:[#allocation2 + $0x78] sm:$0xff]
    %v112 = vpack.c.bf16 %v104, %v96
    %v113 = vpack.c.bf16 %v105, %v97
    %v114 = vpack.c.bf16 %v106, %v98
    %v115 = vpack.c.bf16 %v107, %v99
    %v116 = vpack.c.bf16 %v108, %v100
    %v117 = vpack.c.bf16 %v109, %v101
    %v118 = vpack.c.bf16 %v110, %v102
    %v119 = vpack.c.bf16 %v111, %v103
    %v120 = vld [vmem:[#allocation5] sm:$0xf]
    %v121 = vld [vmem:[#allocation5 + $0x4] sm:$0xf]
    %v122 = vld [vmem:[#allocation5 + $0x8] sm:$0xf]
    %v123 = vld [vmem:[#allocation5 + $0xc] sm:$0xf]
    %v124 = vld [vmem:[#allocation5 + $0x10] sm:$0xf]
    %v125 = vld [vmem:[#allocation5 + $0x14] sm:$0xf]
    %v126 = vld [vmem:[#allocation5 + $0x18] sm:$0xf]
    %v127 = vld [vmem:[#allocation5 + $0x1c] sm:$0xf]
    %v128 = vld [vmem:[#allocation5 + $0x20] sm:$0xf]
    %v129 = vld [vmem:[#allocation5 + $0x24] sm:$0xf]
    %v130 = vld [vmem:[#allocation5 + $0x28] sm:$0xf]
    %v131 = vld [vmem:[#allocation5 + $0x2c] sm:$0xf]
    %v132 = vld [vmem:[#allocation5 + $0x30] sm:$0xf]
    %v133 = vld [vmem:[#allocation5 + $0x34] sm:$0xf]
    %v134 = vld [vmem:[#allocation5 + $0x38] sm:$0xf]
    %v135 = vld [vmem:[#allocation5 + $0x3c] sm:$0xf]
    %v136 = vld [vmem:[#allocation5 + $0x40] sm:$0xf]
    %v137 = vld [vmem:[#allocation5 + $0x44] sm:$0xf]
    %v138 = vld [vmem:[#allocation5 + $0x48] sm:$0xf]
    %v139 = vld [vmem:[#allocation5 + $0x4c] sm:$0xf]
    %v140 = vld [vmem:[#allocation5 + $0x50] sm:$0xf]
    %v141 = vld [vmem:[#allocation5 + $0x54] sm:$0xf]
    %v142 = vld [vmem:[#allocation5 + $0x58] sm:$0xf]
    %v143 = vld [vmem:[#allocation5 + $0x5c] sm:$0xf]
    %v144 = vld [vmem:[#allocation5 + $0x60] sm:$0xf]
    %v145 = vld [vmem:[#allocation5 + $0x64] sm:$0xf]
    %v146 = vld [vmem:[#allocation5 + $0x68] sm:$0xf]
    %v147 = vld [vmem:[#allocation5 + $0x6c] sm:$0xf]
    %v148 = vld [vmem:[#allocation5 + $0x70] sm:$0xf]
    %v149 = vld [vmem:[#allocation5 + $0x74] sm:$0xf]
    %v150 = vld [vmem:[#allocation5 + $0x78] sm:$0xf]
    %v151 = vld [vmem:[#allocation5 + $0x7c] sm:$0xf]
    %v152 = vld [vmem:[#allocation5 + $0x80] sm:$0xf]
    %v153 = vld [vmem:[#allocation5 + $0x84] sm:$0xf]
    %v154 = vld [vmem:[#allocation5 + $0x88] sm:$0xf]
    %v155 = vld [vmem:[#allocation5 + $0x8c] sm:$0xf]
    %v156 = vld [vmem:[#allocation5 + $0x90] sm:$0xf]
    %v157 = vld [vmem:[#allocation5 + $0x94] sm:$0xf]
    %v158 = vld [vmem:[#allocation5 + $0x98] sm:$0xf]
    %v159 = vld [vmem:[#allocation5 + $0x9c] sm:$0xf]
    %v160 = vld [vmem:[#allocation5 + $0xa0] sm:$0xf]
    %v161 = vld [vmem:[#allocation5 + $0xa4] sm:$0xf]
    %v162 = vld [vmem:[#allocation5 + $0xa8] sm:$0xf]
    %v163 = vld [vmem:[#allocation5 + $0xac] sm:$0xf]
    %v164 = vld [vmem:[#allocation5 + $0xb0] sm:$0xf]
    %v165 = vld [vmem:[#allocation5 + $0xb4] sm:$0xf]
    %v166 = vld [vmem:[#allocation5 + $0xb8] sm:$0xf]
    %v167 = vld [vmem:[#allocation5 + $0xbc] sm:$0xf]
    %v168 = vld [vmem:[#allocation5 + $0xc0] sm:$0xf]
    %v169 = vld [vmem:[#allocation5 + $0xc4] sm:$0xf]
    %v170 = vld [vmem:[#allocation5 + $0xc8] sm:$0xf]
    %v171 = vld [vmem:[#allocation5 + $0xcc] sm:$0xf]
    %v172 = vld [vmem:[#allocation5 + $0xd0] sm:$0xf]
    %v173 = vld [vmem:[#allocation5 + $0xd4] sm:$0xf]
    %v174 = vld [vmem:[#allocation5 + $0xd8] sm:$0xf]
    %v175 = vld [vmem:[#allocation5 + $0xdc] sm:$0xf]
    %v176 = vld [vmem:[#allocation5 + $0xe0] sm:$0xf]
    %v177 = vld [vmem:[#allocation5 + $0xe4] sm:$0xf]
    %v178 = vld [vmem:[#allocation5 + $0xe8] sm:$0xf]
    %v179 = vld [vmem:[#allocation5 + $0xec] sm:$0xf]
    %v180 = vld [vmem:[#allocation5 + $0xf0] sm:$0xf]
    %v181 = vld [vmem:[#allocation5 + $0xf4] sm:$0xf]
    %v182 = vld [vmem:[#allocation5 + $0xf8] sm:$0xf]
    %v183 = vld [vmem:[#allocation5 + $0xfc] sm:$0xf]
    %v184 = vld [vmem:[#allocation5 + $0x100] sm:$0xf]
    %v185 = vld [vmem:[#allocation5 + $0x104] sm:$0xf]
    %v186 = vld [vmem:[#allocation5 + $0x108] sm:$0xf]
    %v187 = vld [vmem:[#allocation5 + $0x10c] sm:$0xf]
    %v188 = vld [vmem:[#allocation5 + $0x110] sm:$0xf]
    %v189 = vld [vmem:[#allocation5 + $0x114] sm:$0xf]
    %v190 = vld [vmem:[#allocation5 + $0x118] sm:$0xf]
    %v191 = vld [vmem:[#allocation5 + $0x11c] sm:$0xf]
    %v192 = vld [vmem:[#allocation5 + $0x120] sm:$0xf]
    %v193 = vld [vmem:[#allocation5 + $0x124] sm:$0xf]
    %v194 = vld [vmem:[#allocation5 + $0x128] sm:$0xf]
    %v195 = vld [vmem:[#allocation5 + $0x12c] sm:$0xf]
    %v196 = vld [vmem:[#allocation5 + $0x130] sm:$0xf]
    %v197 = vld [vmem:[#allocation5 + $0x134] sm:$0xf]
    %v198 = vld [vmem:[#allocation5 + $0x138] sm:$0xf]
    %v199 = vld [vmem:[#allocation5 + $0x13c] sm:$0xf]
    %v200 = vld [vmem:[#allocation5 + $0x140] sm:$0xf]
    %v201 = vld [vmem:[#allocation5 + $0x144] sm:$0xf]
    %v202 = vld [vmem:[#allocation5 + $0x148] sm:$0xf]
    %v203 = vld [vmem:[#allocation5 + $0x14c] sm:$0xf]
    %v204 = vld [vmem:[#allocation5 + $0x150] sm:$0xf]
    %v205 = vld [vmem:[#allocation5 + $0x154] sm:$0xf]
    %v206 = vld [vmem:[#allocation5 + $0x158] sm:$0xf]
    %v207 = vld [vmem:[#allocation5 + $0x15c] sm:$0xf]
    %v208 = vld [vmem:[#allocation5 + $0x160] sm:$0xf]
    %v209 = vld [vmem:[#allocation5 + $0x164] sm:$0xf]
    %v210 = vld [vmem:[#allocation5 + $0x168] sm:$0xf]
    %v211 = vld [vmem:[#allocation5 + $0x16c] sm:$0xf]
    %v212 = vld [vmem:[#allocation5 + $0x170] sm:$0xf]
    %v213 = vld [vmem:[#allocation5 + $0x174] sm:$0xf]
    %v214 = vld [vmem:[#allocation5 + $0x178] sm:$0xf]
    %v215 = vld [vmem:[#allocation5 + $0x17c] sm:$0xf]
    %v216 = vld [vmem:[#allocation5 + $0x180] sm:$0xf]
    %v217 = vld [vmem:[#allocation5 + $0x184] sm:$0xf]
    %v218 = vld [vmem:[#allocation5 + $0x188] sm:$0xf]
    %v219 = vld [vmem:[#allocation5 + $0x18c] sm:$0xf]
    %v220 = vld [vmem:[#allocation5 + $0x190] sm:$0xf]
    %v221 = vld [vmem:[#allocation5 + $0x194] sm:$0xf]
    %v222 = vld [vmem:[#allocation5 + $0x198] sm:$0xf]
    %v223 = vld [vmem:[#allocation5 + $0x19c] sm:$0xf]
    %v224 = vld [vmem:[#allocation5 + $0x1a0] sm:$0xf]
    %v225 = vld [vmem:[#allocation5 + $0x1a4] sm:$0xf]
    %v226 = vld [vmem:[#allocation5 + $0x1a8] sm:$0xf]
    %v227 = vld [vmem:[#allocation5 + $0x1ac] sm:$0xf]
    %v228 = vld [vmem:[#allocation5 + $0x1b0] sm:$0xf]
    %v229 = vld [vmem:[#allocation5 + $0x1b4] sm:$0xf]
    %v230 = vld [vmem:[#allocation5 + $0x1b8] sm:$0xf]
    %v231 = vld [vmem:[#allocation5 + $0x1bc] sm:$0xf]
    %v232 = vld [vmem:[#allocation5 + $0x1c0] sm:$0xf]
    %v233 = vld [vmem:[#allocation5 + $0x1c4] sm:$0xf]
    %v234 = vld [vmem:[#allocation5 + $0x1c8] sm:$0xf]
    %v235 = vld [vmem:[#allocation5 + $0x1cc] sm:$0xf]
    %v236 = vld [vmem:[#allocation5 + $0x1d0] sm:$0xf]
    %v237 = vld [vmem:[#allocation5 + $0x1d4] sm:$0xf]
    %v238 = vld [vmem:[#allocation5 + $0x1d8] sm:$0xf]
    %v239 = vld [vmem:[#allocation5 + $0x1dc] sm:$0xf]
    %v240 = vld [vmem:[#allocation5 + $0x1e0] sm:$0xf]
    %v241 = vld [vmem:[#allocation5 + $0x1e4] sm:$0xf]
    %v242 = vld [vmem:[#allocation5 + $0x1e8] sm:$0xf]
    %v243 = vld [vmem:[#allocation5 + $0x1ec] sm:$0xf]
    %v244 = vld [vmem:[#allocation5 + $0x1f0] sm:$0xf]
    %v245 = vld [vmem:[#allocation5 + $0x1f4] sm:$0xf]
    %v246 = vld [vmem:[#allocation5 + $0x1f8] sm:$0xf]
    %v247 = vld [vmem:[#allocation5 + $0x1fc] sm:$0xf]
    %v376 = vunpack.c.l.b16 %v120
    %v377 = vunpack.c.l.b16 %v121
    %v378 = vunpack.c.l.b16 %v122
    %v379 = vunpack.c.l.b16 %v123
    %v380 = vunpack.c.l.b16 %v124
    %v381 = vunpack.c.l.b16 %v125
    %v382 = vunpack.c.l.b16 %v126
    %v383 = vunpack.c.l.b16 %v127
    %v384 = vunpack.c.l.b16 %v128
    %v385 = vunpack.c.l.b16 %v129
    %v386 = vunpack.c.l.b16 %v130
    %v387 = vunpack.c.l.b16 %v131
    %v388 = vunpack.c.l.b16 %v132
    %v389 = vunpack.c.l.b16 %v133
    %v390 = vunpack.c.l.b16 %v134
    %v391 = vunpack.c.l.b16 %v135
    %v392 = vunpack.c.l.b16 %v136
    %v393 = vunpack.c.l.b16 %v137
    %v394 = vunpack.c.l.b16 %v138
    %v395 = vunpack.c.l.b16 %v139
    %v396 = vunpack.c.l.b16 %v140
    %v397 = vunpack.c.l.b16 %v141
    %v398 = vunpack.c.l.b16 %v142
    %v399 = vunpack.c.l.b16 %v143
    %v400 = vunpack.c.l.b16 %v144
    %v401 = vunpack.c.l.b16 %v145
    %v402 = vunpack.c.l.b16 %v146
    %v403 = vunpack.c.l.b16 %v147
    %v404 = vunpack.c.l.b16 %v148
    %v405 = vunpack.c.l.b16 %v149
    %v406 = vunpack.c.l.b16 %v150
    %v407 = vunpack.c.l.b16 %v151
    %v408 = vunpack.c.l.b16 %v152
    %v409 = vunpack.c.l.b16 %v153
    %v410 = vunpack.c.l.b16 %v154
    %v411 = vunpack.c.l.b16 %v155
    %v412 = vunpack.c.l.b16 %v156
    %v413 = vunpack.c.l.b16 %v157
    %v414 = vunpack.c.l.b16 %v158
    %v415 = vunpack.c.l.b16 %v159
    %v416 = vunpack.c.l.b16 %v160
    %v417 = vunpack.c.l.b16 %v161
    %v418 = vunpack.c.l.b16 %v162
    %v419 = vunpack.c.l.b16 %v163
    %v420 = vunpack.c.l.b16 %v164
    %v421 = vunpack.c.l.b16 %v165
    %v422 = vunpack.c.l.b16 %v166
    %v423 = vunpack.c.l.b16 %v167
    %v424 = vunpack.c.l.b16 %v168
    %v425 = vunpack.c.l.b16 %v169
    %v426 = vunpack.c.l.b16 %v170
    %v427 = vunpack.c.l.b16 %v171
    %v428 = vunpack.c.l.b16 %v172
    %v429 = vunpack.c.l.b16 %v173
    %v430 = vunpack.c.l.b16 %v174
    %v431 = vunpack.c.l.b16 %v175
    %v432 = vunpack.c.l.b16 %v176
    %v433 = vunpack.c.l.b16 %v177
    %v434 = vunpack.c.l.b16 %v178
    %v435 = vunpack.c.l.b16 %v179
    %v436 = vunpack.c.l.b16 %v180
    %v437 = vunpack.c.l.b16 %v181
    %v438 = vunpack.c.l.b16 %v182
    %v439 = vunpack.c.l.b16 %v183
    %v440 = vunpack.c.l.b16 %v184
    %v441 = vunpack.c.l.b16 %v185
    %v442 = vunpack.c.l.b16 %v186
    %v443 = vunpack.c.l.b16 %v187
    %v444 = vunpack.c.l.b16 %v188
    %v445 = vunpack.c.l.b16 %v189
    %v446 = vunpack.c.l.b16 %v190
    %v447 = vunpack.c.l.b16 %v191
    %v448 = vunpack.c.l.b16 %v192
    %v449 = vunpack.c.l.b16 %v193
    %v450 = vunpack.c.l.b16 %v194
    %v451 = vunpack.c.l.b16 %v195
    %v452 = vunpack.c.l.b16 %v196
    %v453 = vunpack.c.l.b16 %v197
    %v454 = vunpack.c.l.b16 %v198
    %v455 = vunpack.c.l.b16 %v199
    %v456 = vunpack.c.l.b16 %v200
    %v457 = vunpack.c.l.b16 %v201
    %v458 = vunpack.c.l.b16 %v202
    %v459 = vunpack.c.l.b16 %v203
    %v460 = vunpack.c.l.b16 %v204
    %v461 = vunpack.c.l.b16 %v205
    %v462 = vunpack.c.l.b16 %v206
    %v463 = vunpack.c.l.b16 %v207
    %v464 = vunpack.c.l.b16 %v208
    %v465 = vunpack.c.l.b16 %v209
    %v466 = vunpack.c.l.b16 %v210
    %v467 = vunpack.c.l.b16 %v211
    %v468 = vunpack.c.l.b16 %v212
    %v469 = vunpack.c.l.b16 %v213
    %v470 = vunpack.c.l.b16 %v214
    %v471 = vunpack.c.l.b16 %v215
    %v472 = vunpack.c.l.b16 %v216
    %v473 = vunpack.c.l.b16 %v217
    %v474 = vunpack.c.l.b16 %v218
    %v475 = vunpack.c.l.b16 %v219
    %v476 = vunpack.c.l.b16 %v220
    %v477 = vunpack.c.l.b16 %v221
    %v478 = vunpack.c.l.b16 %v222
    %v479 = vunpack.c.l.b16 %v223
    %v480 = vunpack.c.l.b16 %v224
    %v481 = vunpack.c.l.b16 %v225
    %v482 = vunpack.c.l.b16 %v226
    %v483 = vunpack.c.l.b16 %v227
    %v484 = vunpack.c.l.b16 %v228
    %v485 = vunpack.c.l.b16 %v229
    %v486 = vunpack.c.l.b16 %v230
    %v487 = vunpack.c.l.b16 %v231
    %v488 = vunpack.c.l.b16 %v232
    %v489 = vunpack.c.l.b16 %v233
    %v490 = vunpack.c.l.b16 %v234
    %v491 = vunpack.c.l.b16 %v235
    %v492 = vunpack.c.l.b16 %v236
    %v493 = vunpack.c.l.b16 %v237
    %v494 = vunpack.c.l.b16 %v238
    %v495 = vunpack.c.l.b16 %v239
    %v496 = vunpack.c.l.b16 %v240
    %v497 = vunpack.c.l.b16 %v241
    %v498 = vunpack.c.l.b16 %v242
    %v499 = vunpack.c.l.b16 %v243
    %v500 = vunpack.c.l.b16 %v244
    %v501 = vunpack.c.l.b16 %v245
    %v502 = vunpack.c.l.b16 %v246
    %v503 = vunpack.c.l.b16 %v247
    %v504 = vpack.c.b16 %v377, %v376
    %v505 = vpack.c.b16 %v379, %v378
    %v506 = vpack.c.b16 %v381, %v380
    %v507 = vpack.c.b16 %v383, %v382
    %v508 = vpack.c.b16 %v385, %v384
    %v509 = vpack.c.b16 %v387, %v386
    %v510 = vpack.c.b16 %v389, %v388
    %v511 = vpack.c.b16 %v391, %v390
    %v512 = vpack.c.b16 %v393, %v392
    %v513 = vpack.c.b16 %v395, %v394
    %v514 = vpack.c.b16 %v397, %v396
    %v515 = vpack.c.b16 %v399, %v398
    %v516 = vpack.c.b16 %v401, %v400
    %v517 = vpack.c.b16 %v403, %v402
    %v518 = vpack.c.b16 %v405, %v404
    %v519 = vpack.c.b16 %v407, %v406
    %v520 = vpack.c.b16 %v409, %v408
    %v521 = vpack.c.b16 %v411, %v410
    %v522 = vpack.c.b16 %v413, %v412
    %v523 = vpack.c.b16 %v415, %v414
    %v524 = vpack.c.b16 %v417, %v416
    %v525 = vpack.c.b16 %v419, %v418
    %v526 = vpack.c.b16 %v421, %v420
    %v527 = vpack.c.b16 %v423, %v422
    %v528 = vpack.c.b16 %v425, %v424
    %v529 = vpack.c.b16 %v427, %v426
    %v530 = vpack.c.b16 %v429, %v428
    %v531 = vpack.c.b16 %v431, %v430
    %v532 = vpack.c.b16 %v433, %v432
    %v533 = vpack.c.b16 %v435, %v434
    %v534 = vpack.c.b16 %v437, %v436
    %v535 = vpack.c.b16 %v439, %v438
    %v536 = vpack.c.b16 %v441, %v440
    %v537 = vpack.c.b16 %v443, %v442
    %v538 = vpack.c.b16 %v445, %v444
    %v539 = vpack.c.b16 %v447, %v446
    %v540 = vpack.c.b16 %v449, %v448
    %v541 = vpack.c.b16 %v451, %v450
    %v542 = vpack.c.b16 %v453, %v452
    %v543 = vpack.c.b16 %v455, %v454
    %v544 = vpack.c.b16 %v457, %v456
    %v545 = vpack.c.b16 %v459, %v458
    %v546 = vpack.c.b16 %v461, %v460
    %v547 = vpack.c.b16 %v463, %v462
    %v548 = vpack.c.b16 %v465, %v464
    %v549 = vpack.c.b16 %v467, %v466
    %v550 = vpack.c.b16 %v469, %v468
    %v551 = vpack.c.b16 %v471, %v470
    %v552 = vpack.c.b16 %v473, %v472
    %v553 = vpack.c.b16 %v475, %v474
    %v554 = vpack.c.b16 %v477, %v476
    %v555 = vpack.c.b16 %v479, %v478
    %v556 = vpack.c.b16 %v481, %v480
    %v557 = vpack.c.b16 %v483, %v482
    %v558 = vpack.c.b16 %v485, %v484
    %v559 = vpack.c.b16 %v487, %v486
    %v560 = vpack.c.b16 %v489, %v488
    %v561 = vpack.c.b16 %v491, %v490
    %v562 = vpack.c.b16 %v493, %v492
    %v563 = vpack.c.b16 %v495, %v494
    %v564 = vpack.c.b16 %v497, %v496
    %v565 = vpack.c.b16 %v499, %v498
    %v566 = vpack.c.b16 %v501, %v500
    %v567 = vpack.c.b16 %v503, %v502
    %632 = vmatpush.bf16.msra.mxu0 %v511
    %633 = vmatpush.bf16.msra.mxu0 %v510
    %634 = vmatpush.bf16.msra.mxu0 %v509
    %635 = vmatpush.bf16.msra.mxu0 %v508
    %636 = vmatpush.bf16.msra.mxu0 %v507
    %637 = vmatpush.bf16.msra.mxu0 %v506
    %638 = vmatpush.bf16.msra.mxu0 %v505
    %639 = vmatpush.bf16.msra.mxu0 %v504
    %640 = vmatmul.bf16.gmra.mxu0 %v112
    %v641 = vpop.f32.mrf.mxu0
    %v642 = vadd.f32 0.0, %v641
    %v643 = vpop.f32.mrf.mxu0
    %v644 = vadd.f32 0.0, %v643
    %645 = vdwg.mxu0
    %646 = vmatpush.bf16.msra.mxu0 %v519
    %647 = vmatpush.bf16.msra.mxu0 %v518
    %648 = vmatpush.bf16.msra.mxu0 %v517
    %649 = vmatpush.bf16.msra.mxu0 %v516
    %650 = vmatpush.bf16.msra.mxu0 %v515
    %651 = vmatpush.bf16.msra.mxu0 %v514
    %652 = vmatpush.bf16.msra.mxu0 %v513
    %653 = vmatpush.bf16.msra.mxu0 %v512
    %654 = vmatmul.bf16.gmra.mxu0 %v113
    %v655 = vpop.f32.mrf.mxu0
    %v656 = vadd.f32 %v642, %v655
    %v657 = vpop.f32.mrf.mxu0
    %v658 = vadd.f32 %v644, %v657
    %659 = vdwg.mxu0
    %660 = vmatpush.bf16.msra.mxu0 %v527
    %661 = vmatpush.bf16.msra.mxu0 %v526
    %662 = vmatpush.bf16.msra.mxu0 %v525
    %663 = vmatpush.bf16.msra.mxu0 %v524
    %664 = vmatpush.bf16.msra.mxu0 %v523
    %665 = vmatpush.bf16.msra.mxu0 %v522
    %666 = vmatpush.bf16.msra.mxu0 %v521
    %667 = vmatpush.bf16.msra.mxu0 %v520
    %668 = vmatmul.bf16.gmra.mxu0 %v114
    %v669 = vpop.f32.mrf.mxu0
    %v670 = vadd.f32 %v656, %v669
    %v671 = vpop.f32.mrf.mxu0
    %v672 = vadd.f32 %v658, %v671
    %673 = vdwg.mxu0
    %674 = vmatpush.bf16.msra.mxu0 %v535
    %675 = vmatpush.bf16.msra.mxu0 %v534
    %676 = vmatpush.bf16.msra.mxu0 %v533
    %677 = vmatpush.bf16.msra.mxu0 %v532
    %678 = vmatpush.bf16.msra.mxu0 %v531
    %679 = vmatpush.bf16.msra.mxu0 %v530
    %680 = vmatpush.bf16.msra.mxu0 %v529
    %681 = vmatpush.bf16.msra.mxu0 %v528
    %682 = vmatmul.bf16.gmra.mxu0 %v115
    %v683 = vpop.f32.mrf.mxu0
    %v684 = vadd.f32 %v670, %v683
    %v685 = vpop.f32.mrf.mxu0
    %v686 = vadd.f32 %v672, %v685
    %687 = vdwg.mxu0
    %688 = vmatpush.bf16.msra.mxu0 %v543
    %689 = vmatpush.bf16.msra.mxu0 %v542
    %690 = vmatpush.bf16.msra.mxu0 %v541
    %691 = vmatpush.bf16.msra.mxu0 %v540
    %692 = vmatpush.bf16.msra.mxu0 %v539
    %693 = vmatpush.bf16.msra.mxu0 %v538
    %694 = vmatpush.bf16.msra.mxu0 %v537
    %695 = vmatpush.bf16.msra.mxu0 %v536
    %696 = vmatmul.bf16.gmra.mxu0 %v116
    %v697 = vpop.f32.mrf.mxu0
    %v698 = vadd.f32 %v684, %v697
    %v699 = vpop.f32.mrf.mxu0
    %v700 = vadd.f32 %v686, %v699
    %701 = vdwg.mxu0
    %702 = vmatpush.bf16.msra.mxu0 %v551
    %703 = vmatpush.bf16.msra.mxu0 %v550
    %704 = vmatpush.bf16.msra.mxu0 %v549
    %705 = vmatpush.bf16.msra.mxu0 %v548
    %706 = vmatpush.bf16.msra.mxu0 %v547
    %707 = vmatpush.bf16.msra.mxu0 %v546
    %708 = vmatpush.bf16.msra.mxu0 %v545
    %709 = vmatpush.bf16.msra.mxu0 %v544
    %710 = vmatmul.bf16.gmra.mxu0 %v117
    %v711 = vpop.f32.mrf.mxu0
    %v712 = vadd.f32 %v698, %v711
    %v713 = vpop.f32.mrf.mxu0
    %v714 = vadd.f32 %v700, %v713
    %715 = vdwg.mxu0
    %716 = vmatpush.bf16.msra.mxu0 %v559
    %717 = vmatpush.bf16.msra.mxu0 %v558
    %718 = vmatpush.bf16.msra.mxu0 %v557
    %719 = vmatpush.bf16.msra.mxu0 %v556
    %720 = vmatpush.bf16.msra.mxu0 %v555
    %721 = vmatpush.bf16.msra.mxu0 %v554
    %722 = vmatpush.bf16.msra.mxu0 %v553
    %723 = vmatpush.bf16.msra.mxu0 %v552
    %724 = vmatmul.bf16.gmra.mxu0 %v118
    %v725 = vpop.f32.mrf.mxu0
    %v726 = vadd.f32 %v712, %v725
    %v727 = vpop.f32.mrf.mxu0
    %v728 = vadd.f32 %v714, %v727
    %729 = vdwg.mxu0
    %730 = vmatpush.bf16.msra.mxu0 %v567
    %731 = vmatpush.bf16.msra.mxu0 %v566
    %732 = vmatpush.bf16.msra.mxu0 %v565
    %733 = vmatpush.bf16.msra.mxu0 %v564
    %734 = vmatpush.bf16.msra.mxu0 %v563
    %735 = vmatpush.bf16.msra.mxu0 %v562
    %736 = vmatpush.bf16.msra.mxu0 %v561
    %737 = vmatpush.bf16.msra.mxu0 %v560
    %738 = vmatmul.bf16.gmra.mxu0 %v119
    %v739 = vpop.f32.mrf.mxu0
    %v740 = vadd.f32 %v726, %v739
    %v741 = vpop.f32.mrf.mxu0
    %v742 = vadd.f32 %v728, %v741
    %743 = vdwg.mxu0
    %v744 = vld [vmem:[%s2] sm:$0x1]
    %v746 = vperm.slane %v744, 0
    %v748 = vmul.f32 %v740, %v746
    %v749 = vmul.f32 %v742, %v746
    %v750 = vld [vmem:[%s3] sm:$0x1]
    %v752 = vperm.slane %v750, 0
    %v754 = vadd.f32 %v748, %v752
    %v755 = vadd.f32 %v749, %v752
    %v756 = vmax.f32 %v754, 0.0
    %v757 = vmax.f32 %v755, 0.0
    %v758 = vpack.c.bf16 %v757, %v756
    %v759 = vld [vmem:[#allocation7] sm:$0xf]
    %v760 = vld [vmem:[#allocation7 + $0x4] sm:$0xf]
    %v761 = vld [vmem:[#allocation7 + $0x8] sm:$0xf]
    %v762 = vld [vmem:[#allocation7 + $0xc] sm:$0xf]
    %v763 = vld [vmem:[#allocation7 + $0x10] sm:$0xf]
    %v764 = vld [vmem:[#allocation7 + $0x14] sm:$0xf]
    %v765 = vld [vmem:[#allocation7 + $0x18] sm:$0xf]
    %v766 = vld [vmem:[#allocation7 + $0x1c] sm:$0xf]
    %v767 = vld [vmem:[#allocation7 + $0x20] sm:$0xf]
    %v768 = vld [vmem:[#allocation7 + $0x24] sm:$0xf]
    %v769 = vld [vmem:[#allocation7 + $0x28] sm:$0xf]
    %v770 = vld [vmem:[#allocation7 + $0x2c] sm:$0xf]
    %v771 = vld [vmem:[#allocation7 + $0x30] sm:$0xf]
    %v772 = vld [vmem:[#allocation7 + $0x34] sm:$0xf]
    %v773 = vld [vmem:[#allocation7 + $0x38] sm:$0xf]
    %v774 = vld [vmem:[#allocation7 + $0x3c] sm:$0xf]
    %v791 = vunpack.c.l.b16 %v759
    %v792 = vunpack.c.l.b16 %v760
    %v793 = vunpack.c.l.b16 %v761
    %v794 = vunpack.c.l.b16 %v762
    %v795 = vunpack.c.l.b16 %v763
    %v796 = vunpack.c.l.b16 %v764
    %v797 = vunpack.c.l.b16 %v765
    %v798 = vunpack.c.l.b16 %v766
    %v799 = vunpack.c.l.b16 %v767
    %v800 = vunpack.c.l.b16 %v768
    %v801 = vunpack.c.l.b16 %v769
    %v802 = vunpack.c.l.b16 %v770
    %v803 = vunpack.c.l.b16 %v771
    %v804 = vunpack.c.l.b16 %v772
    %v805 = vunpack.c.l.b16 %v773
    %v806 = vunpack.c.l.b16 %v774
    %v807 = vpack.c.b16 %v792, %v791
    %v808 = vpack.c.b16 %v794, %v793
    %v809 = vpack.c.b16 %v796, %v795
    %v810 = vpack.c.b16 %v798, %v797
    %v811 = vpack.c.b16 %v800, %v799
    %v812 = vpack.c.b16 %v802, %v801
    %v813 = vpack.c.b16 %v804, %v803
    %v814 = vpack.c.b16 %v806, %v805
    %823 = vmatpush.bf16.msra.mxu0 %v814
    %824 = vmatpush.bf16.msra.mxu0 %v813
    %825 = vmatpush.bf16.msra.mxu0 %v812
    %826 = vmatpush.bf16.msra.mxu0 %v811
    %827 = vmatpush.bf16.msra.mxu0 %v810
    %828 = vmatpush.bf16.msra.mxu0 %v809
    %829 = vmatpush.bf16.msra.mxu0 %v808
    %830 = vmatpush.bf16.msra.mxu0 %v807
    %831 = vmatmul.bf16.gmra.mxu0 %v758
    %v832 = vpop.f32.mrf.mxu0
    %v833 = vadd.f32 0.0, %v832
    %v834 = vpop.f32.mrf.mxu0
    %v835 = vadd.f32 0.0, %v834
    %836 = vdwg.mxu0
    %v837 = vld [vmem:[%s5] sm:$0x1]
    %v839 = vperm.slane %v837, 0
    %v841 = vmul.f32 %v833, %v839
    %v842 = vmul.f32 %v835, %v839
    %v843 = vld [vmem:[%s6] sm:$0x1]
    %v845 = vperm.slane %v843, 0
    %v847 = vadd.f32 %v841, %v845
    %v848 = vadd.f32 %v842, %v845
    %v849 = vmax.f32 %v847, 0.0
    %v850 = vmax.f32 %v848, 0.0
    %v851 = vpack.c.bf16 %v850, %v849
    %v852 = vld [vmem:[#allocation8] sm:$0xf]
    %v853 = vld [vmem:[#allocation8 + $0x4] sm:$0xf]
    %v854 = vld [vmem:[#allocation8 + $0x8] sm:$0xf]
    %v855 = vld [vmem:[#allocation8 + $0xc] sm:$0xf]
    %v856 = vld [vmem:[#allocation8 + $0x10] sm:$0xf]
    %v857 = vld [vmem:[#allocation8 + $0x14] sm:$0xf]
    %v858 = vld [vmem:[#allocation8 + $0x18] sm:$0xf]
    %v859 = vld [vmem:[#allocation8 + $0x1c] sm:$0xf]
    %v860 = vld [vmem:[#allocation8 + $0x20] sm:$0xf]
    %v861 = vld [vmem:[#allocation8 + $0x24] sm:$0xf]
    %v862 = vld [vmem:[#allocation8 + $0x28] sm:$0xf]
    %v863 = vld [vmem:[#allocation8 + $0x2c] sm:$0xf]
    %v864 = vld [vmem:[#allocation8 + $0x30] sm:$0xf]
    %v865 = vld [vmem:[#allocation8 + $0x34] sm:$0xf]
    %v866 = vld [vmem:[#allocation8 + $0x38] sm:$0xf]
    %v867 = vld [vmem:[#allocation8 + $0x3c] sm:$0xf]
    %v868 = vld [vmem:[%s8] sm:$0x1]
    %v870 = vperm.slane %v868, 0
    %v888 = vunpack.c.l.b16 %v852
    %v889 = vunpack.c.l.b16 %v853
    %v890 = vunpack.c.l.b16 %v854
    %v891 = vunpack.c.l.b16 %v855
    %v892 = vunpack.c.l.b16 %v856
    %v893 = vunpack.c.l.b16 %v857
    %v894 = vunpack.c.l.b16 %v858
    %v895 = vunpack.c.l.b16 %v859
    %v896 = vunpack.c.l.b16 %v860
    %v897 = vunpack.c.l.b16 %v861
    %v898 = vunpack.c.l.b16 %v862
    %v899 = vunpack.c.l.b16 %v863
    %v900 = vunpack.c.l.b16 %v864
    %v901 = vunpack.c.l.b16 %v865
    %v902 = vunpack.c.l.b16 %v866
    %v903 = vunpack.c.l.b16 %v867
    %v904 = vpack.c.b16 %v889, %v888
    %v905 = vpack.c.b16 %v891, %v890
    %v906 = vpack.c.b16 %v893, %v892
    %v907 = vpack.c.b16 %v895, %v894
    %v908 = vpack.c.b16 %v897, %v896
    %v909 = vpack.c.b16 %v899, %v898
    %v910 = vpack.c.b16 %v901, %v900
    %v911 = vpack.c.b16 %v903, %v902
    %920 = vmatpush.bf16.msra.mxu0 %v911
    %921 = vmatpush.bf16.msra.mxu0 %v910
    %922 = vmatpush.bf16.msra.mxu0 %v909
    %923 = vmatpush.bf16.msra.mxu0 %v908
    %924 = vmatpush.bf16.msra.mxu0 %v907
    %925 = vmatpush.bf16.msra.mxu0 %v906
    %926 = vmatpush.bf16.msra.mxu0 %v905
    %927 = vmatpush.bf16.msra.mxu0 %v904
    %928 = vmatmul.bf16.gmra.mxu0 %v851
    %v929 = vpop.f32.mrf.mxu0
    %v930 = vadd.f32 %v870, %v929
    %v931 = vpop.f32.mrf.mxu0
    %v932 = vadd.f32 %v870, %v931
    %933 = vdwg.mxu0
    %934 = vst [vmem:[#allocation10] sm:$0xff] %v930
    %935 = vst [vmem:[#allocation10 + $0x8] sm:$0xff] %v932
    // Predicated region
    $region54: #{tpu_custom_call.1} parent=1 // pred_check
      _
    $region55: #{tpu_custom_call.1} parent=1 // pred_check_branch
      %937 = sbr.rel (0) target = $region57
    $region56: #{tpu_custom_call.1} parent=1 // pred_region
      %939 = vsyncadd [#allocation4], 0
      %s940 = sshll.u32 [#allocation10], 4
      %s941 = int_to_ptr.vmem [resolvable:$true] %s940
      %s942 = sshll.u32 %s9, 4
      %s943 = int_to_ptr.hbm [resolvable:$true] %s942
      %948 = dma.vmem_to_hbm [thread:$0]  %s941, 256, %s943, [#allocation4], 128, 128, 8
    $region57: #{tpu_custom_call.1} parent=1 // pred_fallthru
      _
    // Predicated region
    $region58: #{tpu_custom_call.1} parent=1 // pred_check
      _
    $region59: #{tpu_custom_call.1} parent=1 // pred_check_branch
      %950 = sbr.rel (0) target = $region61
    $region60: #{tpu_custom_call.1} parent=1 // pred_region
      %952 = dma.done [#allocation4], 256
    $region61: #{tpu_custom_call.1} parent=1 // pred_fallthru
      _
    %953 = vsyncpa [#allocation3], 1
    %954 = vsyncpa [#allocation6], 1
    %955 = vsyncpa [#allocation9], 1
    %956 = vsyncpa [#allocation4], 1

</llo_original>
